<compile_context>
chip_gen: v6e
topology: v6e:2x2x1
jax: 0.10.0
libtpu: 0.0.40
codegen_flags: <defaults>
</compile_context>

<pallas_src>
from functools import partial

import jax
import jax.numpy as jnp
from jax import lax
from jax.experimental import pallas as pl
from jax.experimental.pallas import tpu as pltpu

TM_MAX = 512                      # max row tile for the conv matmul kernel
VMEM_LIMIT = 48 * 1024 * 1024     # <= 64 MiB so it is valid on v7x as well


def _round_up(x, m):
    return (x + m - 1) // m * m


def _pair(v):
    return v if isinstance(v, tuple) else (v, v)


# ----------------------------- Pallas kernels ------------------------------

def _matmul_bn_relu_kernel(x_ref, w_ref, s_ref, b_ref, o_ref):
    acc = jnp.dot(x_ref[...], w_ref[...], preferred_element_type=jnp.float32)
    o_ref[...] = jnp.maximum(acc * s_ref[...] + b_ref[...], 0.0).astype(o_ref.dtype)


def matmul_bn_relu(x, w, scale, bias):
    """Fused im2col-conv (as matmul, bf16 MXU) + folded BatchNorm + ReLU."""
    M, K = x.shape
    Cout = w.shape[1]
    tm = M if M <= TM_MAX else TM_MAX
    tn = 128 if (Cout % 128 == 0 and Cout >= 256) else Cout
    grid = (pl.cdiv(M, tm), pl.cdiv(Cout, tn))
    cost = pl.CostEstimate(
        flops=2 * M * K * Cout,
        transcendentals=0,
        bytes_accessed=2 * (M * K + K * Cout + M * Cout) + 8 * Cout)
    return pl.pallas_call(
        _matmul_bn_relu_kernel,
        out_shape=jax.ShapeDtypeStruct((M, Cout), jnp.bfloat16),
        grid=grid,
        in_specs=[pl.BlockSpec((tm, K), lambda i, j: (i, 0)),
                  pl.BlockSpec((K, tn), lambda i, j: (0, j)),
                  pl.BlockSpec((1, tn), lambda i, j: (0, j)),
                  pl.BlockSpec((1, tn), lambda i, j: (0, j))],
        out_specs=pl.BlockSpec((tm, tn), lambda i, j: (i, j)),
        compiler_params=pltpu.CompilerParams(
            dimension_semantics=("parallel", "parallel"),
            vmem_limit_bytes=VMEM_LIMIT),
        cost_estimate=cost,
    )(x.astype(jnp.bfloat16), w, scale, bias)


def _matmul_kernel(x_ref, w_ref, o_ref):
    o_ref[...] = jnp.dot(x_ref[...], w_ref[...],
                         preferred_element_type=jnp.float32)


@jax.jit
def final_linear(feat, w_pad):
    """Bias-free last linear; weight is pre-padded to a lane-dense width."""
    M, K = feat.shape
    Np = w_pad.shape[1]
    return pl.pallas_call(
        _matmul_kernel,
        out_shape=jax.ShapeDtypeStruct((M, Np), jnp.float32),
        grid=(1,),
        in_specs=[pl.BlockSpec((M, K), lambda i: (0, 0)),
                  pl.BlockSpec((K, Np), lambda i: (0, 0))],
        out_specs=pl.BlockSpec((M, Np), lambda i: (0, 0)),
        compiler_params=pltpu.CompilerParams(vmem_limit_bytes=VMEM_LIMIT),
    )(feat.astype(jnp.bfloat16), w_pad)


def _maxpool3_s1_kernel(x_ref, o_ref):
    # x_ref: (1, H, W, C); o_ref: (1, H-2, W-2, C) -- 3x3 stride-1 max.
    OH, OW = o_ref.shape[1], o_ref.shape[2]
    acc = x_ref[:, 0:OH, 0:OW, :]
    for di in range(3):
        for dj in range(3):
            if di == 0 and dj == 0:
                continue
            acc = jnp.maximum(acc, x_ref[:, di:di + OH, dj:dj + OW, :])
    o_ref[...] = acc.astype(o_ref.dtype)


@jax.jit
def _max_pool_3x3_s2(x):
    """MaxPool2d(3, stride=2): fused stride-1 window max + strided subsample."""
    N, H, W, C = x.shape
    OH1, OW1 = H - 2, W - 2
    y = pl.pallas_call(
        _maxpool3_s1_kernel,
        out_shape=jax.ShapeDtypeStruct((N, OH1, OW1, C), x.dtype),
        grid=(N,),
        in_specs=[pl.BlockSpec((1, H, W, C), lambda n: (n, 0, 0, 0))],
        out_specs=pl.BlockSpec((1, OH1, OW1, C), lambda n: (n, 0, 0, 0)),
        compiler_params=pltpu.CompilerParams(
            dimension_semantics=("parallel",),
            vmem_limit_bytes=VMEM_LIMIT),
    )(x)
    # stride-2 window starts are exactly every other stride-1 start.
    return y[:, ::2, ::2, :]


def max_pool(x, ksize=3, stride=2):
    assert ksize == 3 and stride == 2
    return _max_pool_3x3_s2(x)


def _avgpool3_kernel(x_ref, inv_ref, o_ref):
    # x_ref: (1, H+2, W+2, C) zero-padded; inv_ref: (1, H, W, 1) 1/valid-count.
    H, W = o_ref.shape[1], o_ref.shape[2]
    acc = x_ref[:, 0:H, 0:W, :].astype(jnp.float32)
    for di in range(3):
        for dj in range(3):
            if di == 0 and dj == 0:
                continue
            acc = acc + x_ref[:, di:di + H, dj:dj + W, :].astype(jnp.float32)
    o_ref[...] = (acc * inv_ref[...]).astype(o_ref.dtype)


def _inv_counts(H, W):
    """Reciprocal of valid-cell counts for 3x3 / stride 1 / pad 1 windows."""
    ih = jnp.arange(H)
    ch = (jnp.minimum(ih + 1, H - 1) - jnp.maximum(ih - 1, 0) + 1).astype(jnp.float32)
    iw = jnp.arange(W)
    cw = (jnp.minimum(iw + 1, W - 1) - jnp.maximum(iw - 1, 0) + 1).astype(jnp.float32)
    counts = ch[:, None] * cw[None, :]
    return (1.0 / counts).reshape(1, H, W, 1)


@jax.jit
def avg_pool_3x3_s1(x):
    """AvgPool2d(3, stride=1, padding=1, count_include_pad=False), fused."""
    N, H, W, C = x.shape
    xp = jnp.pad(x, ((0, 0), (1, 1), (1, 1), (0, 0)))
    inv = _inv_counts(H, W)
    return pl.pallas_call(
        _avgpool3_kernel,
        out_shape=jax.ShapeDtypeStruct((N, H, W, C), x.dtype),
        grid=(N,),
        in_specs=[pl.BlockSpec((1, H + 2, W + 2, C), lambda n: (n, 0, 0, 0)),
                  pl.BlockSpec((1, H, W, 1), lambda n: (0, 0, 0, 0))],
        out_specs=pl.BlockSpec((1, H, W, C), lambda n: (n, 0, 0, 0)),
        compiler_params=pltpu.CompilerParams(
            dimension_semantics=("parallel",),
            vmem_limit_bytes=VMEM_LIMIT),
    )(xp, inv)


def _global_avg_kernel(x_ref, o_ref):
    hw = x_ref.shape[1] * x_ref.shape[2]
    s = jnp.sum(x_ref[...].astype(jnp.float32), axis=(1, 2), keepdims=True)
    o_ref[...] = s * (1.0 / hw)


@jax.jit
def global_avg_pool(x):
    N, H, W, C = x.shape
    out = pl.pallas_call(
        _global_avg_kernel,
        out_shape=jax.ShapeDtypeStruct((N, 1, 1, C), jnp.float32),
        grid=(N,),
        in_specs=[pl.BlockSpec((1, H, W, C), lambda n: (n, 0, 0, 0))],
        out_specs=pl.BlockSpec((1, 1, 1, C), lambda n: (n, 0, 0, 0)),
        compiler_params=pltpu.CompilerParams(
            dimension_semantics=("parallel",),
            vmem_limit_bytes=VMEM_LIMIT),
    )(x)
    return out.reshape(N, C)


# ------------------------------- JAX glue ----------------------------------

def _im2col(x, kh, kw, sh, sw, ph, pw):
    """Patch matrix (M, kh*kw*C) built tap-major via slices + concat (no 5-D
    transpose); tap ordering matches a (kh, kw, cin, cout) weight flattening."""
    N, H, W, C = x.shape
    if ph or pw:
        x = jnp.pad(x, ((0, 0), (ph, ph), (pw, pw), (0, 0)))
    Hp, Wp = H + 2 * ph, W + 2 * pw
    OH = (Hp - kh) // sh + 1
    OW = (Wp - kw) // sw + 1
    cols = []
    for i in range(kh):
        for j in range(kw):
            cols.append(lax.slice(
                x, (0, i, j, 0),
                (N, i + (OH - 1) * sh + 1, j + (OW - 1) * sw + 1, C),
                (1, sh, sw, 1)))
    patches = cols[0] if len(cols) == 1 else jnp.concatenate(cols, axis=-1)
    return patches.reshape(N * OH * OW, kh * kw * C), OH, OW


@partial(jax.jit, static_argnames=("kh", "kw", "stride", "padding"))
def _conv_bn_relu(x, w, scale, bias, *, kh, kw, stride, padding):
    sh, sw = stride
    ph, pw = padding
    N, H, W, C = x.shape
    if kh == 1 and kw == 1 and sh == 1 and sw == 1 and ph == 0 and pw == 0:
        xm, OH, OW = x.reshape(N * H * W, C), H, W     # 1x1 conv: no im2col
    else:
        xm, OH, OW = _im2col(x, kh, kw, sh, sw, ph, pw)
    y = matmul_bn_relu(xm, w, scale, bias)
    return y.reshape(N, OH, OW, w.shape[1])


def conv_bn_relu(x, p, stride=1, padding=0):
    """BasicConv2d: conv (no bias) + folded BatchNorm + ReLU."""
    return _conv_bn_relu(x, p['w'], p['scale'], p['bias'],
                         kh=p['kh'], kw=p['kw'],
                         stride=_pair(stride), padding=_pair(padding))


# --------------------------- parameter creation -----------------------------

class KeyGen:
    def __init__(self, seed):
        self._key = jax.random.PRNGKey(seed)

    def __call__(self):
        self._key, sub = jax.random.split(self._key)
        return sub


def init_conv(kg, cin, cout, ksize):
    kh, kw = _pair(ksize)
    fan_in = kh * kw * cin
    w = jax.random.normal(kg(), (fan_in, cout), jnp.float32) * (2.0 / fan_in) ** 0.5
    gamma = jax.random.uniform(kg(), (cout,), jnp.float32, 0.8, 1.2)
    beta = jax.random.normal(kg(), (cout,), jnp.float32) * 0.05
    rmean = jax.random.normal(kg(), (cout,), jnp.float32) * 0.05
    rvar = jax.random.uniform(kg(), (cout,), jnp.float32, 0.8, 1.2)
    eps = 1e-3  # BatchNorm2d(eps=0.001) folded in inference form
    scale = gamma / jnp.sqrt(rvar + eps)
    bias = beta - rmean * scale
    return {'w': w.astype(jnp.bfloat16),
            'scale': scale.reshape(1, cout),
            'bias': bias.reshape(1, cout),
            'kh': kh, 'kw': kw}


def init_mixed_3a(kg):
    return {'conv': init_conv(kg, 64, 96, 3)}


def mixed_3a(p, x):
    x0 = max_pool(x, 3, 2)
    x1 = conv_bn_relu(x, p['conv'], stride=2)
    return jnp.concatenate([x0, x1], axis=-1)


def init_mixed_4a(kg):
    return {'b0_0': init_conv(kg, 160, 64, 1),
            'b0_1': init_conv(kg, 64, 96, 3),
            'b1_0': init_conv(kg, 160, 64, 1),
            'b1_1': init_conv(kg, 64, 64, (1, 7)),
            'b1_2': init_conv(kg, 64, 64, (7, 1)),
            'b1_3': init_conv(kg, 64, 96, 3)}


def mixed_4a(p, x):
    x0 = conv_bn_relu(conv_bn_relu(x, p['b0_0']), p['b0_1'])
    x1 = conv_bn_relu(x, p['b1_0'])
    x1 = conv_bn_relu(x1, p['b1_1'], padding=(0, 3))
    x1 = conv_bn_relu(x1, p['b1_2'], padding=(3, 0))
    x1 = conv_bn_relu(x1, p['b1_3'])
    return jnp.concatenate([x0, x1], axis=-1)


def init_mixed_5a(kg):
    return {'conv': init_conv(kg, 192, 192, 3)}


def mixed_5a(p, x):
    x0 = conv_bn_relu(x, p['conv'], stride=2)
    x1 = max_pool(x, 3, 2)
    return jnp.concatenate([x0, x1], axis=-1)


def init_inception_a(kg):
    return {'b0': init_conv(kg, 384, 96, 1),
            'b1_0': init_conv(kg, 384, 64, 1),
            'b1_1': init_conv(kg, 64, 96, 3),
            'b2_0': init_conv(kg, 384, 64, 1),
            'b2_1': init_conv(kg, 64, 96, 3),
            'b2_2': init_conv(kg, 96, 96, 3),
            'b3': init_conv(kg, 384, 96, 1)}


def inception_a(p, x):
    x0 = conv_bn_relu(x, p['b0'])
    x1 = conv_bn_relu(conv_bn_relu(x, p['b1_0']), p['b1_1'], padding=1)
    x2 = conv_bn_relu(conv_bn_relu(conv_bn_relu(x, p['b2_0']),
                                   p['b2_1'], padding=1), p['b2_2'], padding=1)
    x3 = conv_bn_relu(avg_pool_3x3_s1(x), p['b3'])
    return jnp.concatenate([x0, x1, x2, x3], axis=-1)


def init_reduction_a(kg):
    return {'b0': init_conv(kg, 384, 384, 3),
            'b1_0': init_conv(kg, 384, 192, 1),
            'b1_1': init_conv(kg, 192, 224, 3),
            'b1_2': init_conv(kg, 224, 256, 3)}


def reduction_a(p, x):
    x0 = conv_bn_relu(x, p['b0'], stride=2)
    x1 = conv_bn_relu(conv_bn_relu(conv_bn_relu(x, p['b1_0']),
                                   p['b1_1'], padding=1), p['b1_2'], stride=2)
    x2 = max_pool(x, 3, 2)
    return jnp.concatenate([x0, x1, x2], axis=-1)


def init_inception_b(kg):
    return {'b0': init_conv(kg, 1024, 384, 1),
            'b1_0': init_conv(kg, 1024, 192, 1),
            'b1_1': init_conv(kg, 192, 224, (1, 7)),
            'b1_2': init_conv(kg, 224, 256, (7, 1)),
            'b2_0': init_conv(kg, 1024, 192, 1),
            'b2_1': init_conv(kg, 192, 192, (7, 1)),
            'b2_2': init_conv(kg, 192, 224, (1, 7)),
            'b2_3': init_conv(kg, 224, 224, (7, 1)),
            'b2_4': init_conv(kg, 224, 256, (1, 7)),
            'b3': init_conv(kg, 1024, 128, 1)}


def inception_b(p, x):
    x0 = conv_bn_relu(x, p['b0'])
    x1 = conv_bn_relu(x, p['b1_0'])
    x1 = conv_bn_relu(x1, p['b1_1'], padding=(0, 3))
    x1 = conv_bn_relu(x1, p['b1_2'], padding=(3, 0))
    x2 = conv_bn_relu(x, p['b2_0'])
    x2 = conv_bn_relu(x2, p['b2_1'], padding=(3, 0))
    x2 = conv_bn_relu(x2, p['b2_2'], padding=(0, 3))
    x2 = conv_bn_relu(x2, p['b2_3'], padding=(3, 0))
    x2 = conv_bn_relu(x2, p['b2_4'], padding=(0, 3))
    x3 = conv_bn_relu(avg_pool_3x3_s1(x), p['b3'])
    return jnp.concatenate([x0, x1, x2, x3], axis=-1)


def init_reduction_b(kg):
    return {'b0_0': init_conv(kg, 1024, 192, 1),
            'b0_1': init_conv(kg, 192, 192, 3),
            'b1_0': init_conv(kg, 1024, 256, 1),
            'b1_1': init_conv(kg, 256, 256, (1, 7)),
            'b1_2': init_conv(kg, 256, 320, (7, 1)),
            'b1_3': init_conv(kg, 320, 320, 3)}


def reduction_b(p, x):
    x0 = conv_bn_relu(conv_bn_relu(x, p['b0_0']), p['b0_1'], stride=2)
    x1 = conv_bn_relu(x, p['b1_0'])
    x1 = conv_bn_relu(x1, p['b1_1'], padding=(0, 3))
    x1 = conv_bn_relu(x1, p['b1_2'], padding=(3, 0))
    x1 = conv_bn_relu(x1, p['b1_3'], stride=2)
    x2 = max_pool(x, 3, 2)
    return jnp.concatenate([x0, x1, x2], axis=-1)


def init_inception_c(kg):
    return {'b0': init_conv(kg, 1536, 256, 1),
            'b1_0': init_conv(kg, 1536, 384, 1),
            'b1_1a': init_conv(kg, 384, 256, (1, 3)),
            'b1_1b': init_conv(kg, 384, 256, (3, 1)),
            'b2_0': init_conv(kg, 1536, 384, 1),
            'b2_1': init_conv(kg, 384, 448, (3, 1)),
            'b2_2': init_conv(kg, 448, 512, (1, 3)),
            'b2_3a': init_conv(kg, 512, 256, (1, 3)),
            'b2_3b': init_conv(kg, 512, 256, (3, 1)),
            'b3': init_conv(kg, 1536, 256, 1)}


def inception_c(p, x):
    x0 = conv_bn_relu(x, p['b0'])
    x1_0 = conv_bn_relu(x, p['b1_0'])
    x1a = conv_bn_relu(x1_0, p['b1_1a'], padding=(0, 1))
    x1b = conv_bn_relu(x1_0, p['b1_1b'], padding=(1, 0))
    x1 = jnp.concatenate([x1a, x1b], axis=-1)
    x2_0 = conv_bn_relu(x, p['b2_0'])
    x2_1 = conv_bn_relu(x2_0, p['b2_1'], padding=(1, 0))
    x2_2 = conv_bn_relu(x2_1, p['b2_2'], padding=(0, 1))
    x2a = conv_bn_relu(x2_2, p['b2_3a'], padding=(0, 1))
    x2b = conv_bn_relu(x2_2, p['b2_3b'], padding=(1, 0))
    x2 = jnp.concatenate([x2a, x2b], axis=-1)
    x3 = conv_bn_relu(avg_pool_3x3_s1(x), p['b3'])
    return jnp.concatenate([x0, x1, x2, x3], axis=-1)


def init_inception_v4(seed=0, num_classes=1001):
    kg = KeyGen(seed)
    ncls_pad = _round_up(num_classes, 128)          # lane-dense final matmul
    w_fc = jax.random.normal(kg(), (1536, num_classes),
                             jnp.float32) * (1.0 / 1536.0) ** 0.5
    w_fc = jnp.pad(w_fc, ((0, 0), (0, ncls_pad - num_classes)))
    return {
        'stem0': init_conv(kg, 3, 32, 3),
        'stem1': init_conv(kg, 32, 32, 3),
        'stem2': init_conv(kg, 32, 64, 3),
        'mixed_3a': init_mixed_3a(kg),
        'mixed_4a': init_mixed_4a(kg),
        'mixed_5a': init_mixed_5a(kg),
        'inception_a': [init_inception_a(kg) for _ in range(4)],
        'reduction_a': init_reduction_a(kg),
        'inception_b': [init_inception_b(kg) for _ in range(7)],
        'reduction_b': init_reduction_b(kg),
        'inception_c': [init_inception_c(kg) for _ in range(3)],
        'last_linear': w_fc.astype(jnp.bfloat16),
        'num_classes': num_classes,
    }


def inception_v4_forward(params, x_nchw):
    """Mirrors InceptionV4.forward: returns (feat_triplet, logits)."""
    x = jnp.transpose(x_nchw, (0, 2, 3, 1)).astype(jnp.bfloat16)  # NCHW->NHWC
    x = conv_bn_relu(x, params['stem0'], stride=2)
    x = conv_bn_relu(x, params['stem1'])
    x = conv_bn_relu(x, params['stem2'], padding=1)
    x = mixed_3a(params['mixed_3a'], x)
    x = mixed_4a(params['mixed_4a'], x)
    x = mixed_5a(params['mixed_5a'], x)
    for p in params['inception_a']:
        x = inception_a(p, x)
    x = reduction_a(params['reduction_a'], x)
    for p in params['inception_b']:
        x = inception_b(p, x)
    x = reduction_b(params['reduction_b'], x)
    for p in params['inception_c']:
        x = inception_c(p, x)
    # logits(): global average pool -> flatten -> bias-free linear
    feat = global_avg_pool(x)                                 # (N, 1536) f32
    logits = final_linear(feat, params['last_linear'])
    logits = logits[:, :params['num_classes']]
    return feat, logits


if __name__ == "__main__":
    key = jax.random.PRNGKey(0)
    # 75x75 is the smallest spatial size that survives every valid / stride-2
    # stage of the InceptionV4 stem+reductions (final feature map is 1x1x1536).
    x = jax.random.normal(key, (2, 3, 75, 75), jnp.float32)
    params = init_inception_v4(seed=0, num_classes=1001)
    feat, logits = inception_v4_forward(params, x)
    jax.block_until_ready((feat, logits))
    assert feat.shape == (2, 1536) and logits.shape == (2, 1001)
    assert bool(jnp.all(jnp.isfinite(feat))) and bool(jnp.all(jnp.isfinite(logits)))
    print("KERNEL_OK")
</pallas_src>

<mosaic_0001>
module attributes {stable_mosaic.version = 11 : i64} {
  func.func @_matmul_bn_relu_kernel(%arg0: i32, %arg1: i32, %arg2: memref<512x27xbf16, #tpu.memory_space<vmem>>, %arg3: memref<27x32xbf16, #tpu.memory_space<vmem>>, %arg4: memref<1x32xf32, #tpu.memory_space<vmem>>, %arg5: memref<1x32xf32, #tpu.memory_space<vmem>>, %arg6: memref<512x32xbf16, #tpu.memory_space<vmem>>) attributes {dimension_semantics = [#tpu.dimension_semantics<parallel>, #tpu.dimension_semantics<parallel>], iteration_bounds = array<i64: 6, 1>, scalar_prefetch = 0 : i64, scratch_operands = 0 : i64, tpu.core_type = #tpu.core_type<tc>, window_params = [{transform_indices = @transform_0, window_bounds = array<i64: 512, 27>}, {transform_indices = @transform_1, window_bounds = array<i64: 27, 32>}, {transform_indices = @transform_2, window_bounds = array<i64: 1, 32>}, {transform_indices = @transform_3, window_bounds = array<i64: 1, 32>}, {transform_indices = @transform_4, window_bounds = array<i64: 512, 32>}]} {
    %c0 = arith.constant 0 : index
    %c0_0 = arith.constant 0 : index
    %0 = vector.load %arg2[%c0, %c0_0] : memref<512x27xbf16, #tpu.memory_space<vmem>>, vector<512x27xbf16>
    %c0_1 = arith.constant 0 : index
    %c0_2 = arith.constant 0 : index
    %1 = vector.load %arg3[%c0_1, %c0_2] : memref<27x32xbf16, #tpu.memory_space<vmem>>, vector<27x32xbf16>
    %cst = arith.constant dense<0.000000e+00> : vector<512x32xf32>
    %2 = tpu.matmul %0, %1, %cst {dimension_numbers = #tpu.dot_dimension_numbers<[1], [0], [0], [1], [0, 0, 1, 1], [], []>} : vector<512x27xbf16>, vector<27x32xbf16>, vector<512x32xf32> -> vector<512x32xf32>
    %c0_3 = arith.constant 0 : index
    %c0_4 = arith.constant 0 : index
    %3 = vector.load %arg4[%c0_3, %c0_4] : memref<1x32xf32, #tpu.memory_space<vmem>>, vector<1x32xf32>
    %4 = vector.broadcast %3 : vector<1x32xf32> to vector<512x32xf32>
    %5 = arith.mulf %2, %4 : vector<512x32xf32>
    %c0_5 = arith.constant 0 : index
    %c0_6 = arith.constant 0 : index
    %6 = vector.load %arg5[%c0_5, %c0_6] : memref<1x32xf32, #tpu.memory_space<vmem>>, vector<1x32xf32>
    %7 = vector.broadcast %6 : vector<1x32xf32> to vector<512x32xf32>
    %8 = arith.addf %5, %7 : vector<512x32xf32>
    %cst_7 = arith.constant 0.000000e+00 : f32
    %9 = vector.broadcast %cst_7 : f32 to vector<512x32xf32>
    %10 = arith.maximumf %8, %9 : vector<512x32xf32>
    %11 = arith.truncf %10 : vector<512x32xf32> to vector<512x32xbf16>
    %c0_8 = arith.constant 0 : index
    %c0_9 = arith.constant 0 : index
    %12 = vector.load %arg6[%c0_8, %c0_9] : memref<512x32xbf16, #tpu.memory_space<vmem>>, vector<512x32xbf16>
    tpu.vector_store %arg6[%c0_8, %c0_9], %11 {strides = array<i32>} : memref<512x32xbf16, #tpu.memory_space<vmem>>, vector<512x32xbf16>,
    return
  }
  func.func @transform_0(%arg0: i32, %arg1: i32) -> (i32, i32) {
    %c0_i32 = arith.constant 0 : i32
    %c0_i32_0 = arith.constant 0 : i32
    return %arg0, %c0_i32 : i32, i32
  }
  func.func @transform_1(%arg0: i32, %arg1: i32) -> (i32, i32) {
    %c0_i32 = arith.constant 0 : i32
    %c0_i32_0 = arith.constant 0 : i32
    return %c0_i32, %arg1 : i32, i32
  }
  func.func @transform_2(%arg0: i32, %arg1: i32) -> (i32, i32) {
    %c0_i32 = arith.constant 0 : i32
    %c0_i32_0 = arith.constant 0 : i32
    return %c0_i32, %arg1 : i32, i32
  }
  func.func @transform_3(%arg0: i32, %arg1: i32) -> (i32, i32) {
    %c0_i32 = arith.constant 0 : i32
    %c0_i32_0 = arith.constant 0 : i32
    return %c0_i32, %arg1 : i32, i32
  }
  func.func @transform_4(%arg0: i32, %arg1: i32) -> (i32, i32) {
    %c0_i32 = arith.constant 0 : i32
    return %arg0, %arg1 : i32, i32
  }
}

</mosaic_0001>

<llo_original>
// kernel: _conv_bn_relu.1
$region0: #{_conv_bn_relu.1}
  #allocation0 [shape = 'u32[]', space=smem, size = 0x4, offset = 0x4, fixed_abs, tag = 'smem constant byte address 0x4 - core index']
  #allocation1 [shape = 'u32[144,128]{1,0:T(1,128)}', space=vmem, size = 0x12000, scoped, tag = 'internal scratch']
  %s0 = inlined_call_operand.vmem [shape: bf16[2738,27], index: 0, kind: input, shape index: {}]
  %s1 = inlined_call_operand.vmem [shape: bf16[27,32], index: 1, kind: input, shape index: {}]
  %s2 = inlined_call_operand.vmem [shape: f32[1,32], index: 2, kind: input, shape index: {}]
  %s3 = inlined_call_operand.vmem [shape: f32[1,32], index: 3, kind: input, shape index: {}]
  %s4 = inlined_call_operand.vmem [shape: bf16[2738,32], index: 4, kind: output, shape index: {}]
  %s5 = sld [smem:[#allocation0]]
  $region93: #{_conv_bn_relu.1} parent=0
    _
  %s7 = ssub.s32 1, %s5
  %s8 = scalar_select 0, %s7, %s5
  $region1: #{_conv_bn_relu.1} parent=0
    #allocation2 [shape = 'u8[262144]{0}', space=vmem, size = 0x40000, scoped, tag = 'output window, operand 0']
    loop: start=0, step=1, limit=8
    $region2: #{_conv_bn_relu.1} parent=1 // loop_pre_header
      _
    $region3: #{_conv_bn_relu.1} parent=1 // loop_header
      %s10 = sphi 0, %s14
      %p11 = scmp.ge.s32.totalorder %s10, 8
      %s17 = sphi 0, %s29
      %s18 = sphi 0, %s25
      %s19 = sphi 0, %s17
      %s20 = sphi 0, %s18
      %s21 = sphi 0, %s19
      %s22 = sphi 0, %s20
      %s32 = sphi 0, %s34
      %s35 = sphi 0, %s32
      %s36 = sphi 0, %s35
      %s52 = sphi 0, %s36
      %s58 = sphi 0, %s60
      %s61 = sphi 0, %s58
      %s62 = sphi 0, %s61
      %s78 = sphi 0, %s62
      %s84 = sphi 0, %s86
      %s87 = sphi 0, %s84
      %s88 = sphi 0, %s87
      %s104 = sphi 0, %s88
      %s110 = sphi 0, %s112
      %s113 = sphi 0, %s110
      %s114 = sphi 0, %s113
      %s130 = sphi 0, %s114
      %s138 = sphi 0, %s140
      %s141 = sphi 0, %s138
      %s142 = sphi 0, %s141
      %s158 = sphi 0, %s142
    $region4: #{_conv_bn_relu.1} parent=1 // loop_header_branch
      %13 = sbr.rel (%p11) target = $region8
    $region5: #{_conv_bn_relu.1} parent=1 // loop_body
      %s15 = ssub.s32 %s10, 1
      %s16 = ssub.s32 %s10, 2
      %s23 = sadd.s32 1, %s18
      %p24 = scmp.ge.s32.totalorder %s23, 1
      %s25 = scalar_select %p24, 0, %s23
      %s26 = sadd.s32 1, %s17
      %s27 = scalar_select %p24, %s26, %s17
      %p28 = scmp.ge.s32.totalorder %s27, 6
      %s29 = scalar_select %p28, 0, %s27
      %s30 = ssub.s32 %s17, %s29
      %p31 = scmp.eq.s32.totalorder %s30, 0
      %s33 = sadd.s32 %s32, 1
      %s34 = scalar_select %p31, %s32, %s33
      %p37 = pneg %p31
      %p38 = scmp.eq.s32.totalorder %s10, 5
      %p39 = por %p37, %p38
      %p40 = scmp.ne.s32.totalorder %s32, %s35
      %p41 = scmp.eq.s32.totalorder %s10, 0
      %p42 = por %p40, %p41
      %p43 = scmp.ne.s32.totalorder %s32, %s35
      %p44 = scmp.eq.s32.totalorder %s15, 5
      %p45 = por %p43, %p44
      %p46 = scmp.ne.s32.totalorder %s35, %s36
      %p47 = scmp.eq.s32.totalorder %s15, 0
      %p48 = por %p46, %p47
      %p49 = scmp.ne.s32.totalorder %s35, %s36
      %p50 = scmp.eq.s32.totalorder %s16, 5
      %p51 = por %p49, %p50
      %p53 = scmp.ne.s32.totalorder %s36, %s52
      %p54 = scmp.eq.s32.totalorder %s16, 0
      %p55 = por %p53, %p54
      %s56 = ssub.s32 %s18, %s25
      %p57 = scmp.eq.s32.totalorder %s56, 0
      %s59 = sadd.s32 %s58, 1
      %s60 = scalar_select %p57, %s58, %s59
      %p63 = pneg %p57
      %p64 = scmp.eq.s32.totalorder %s10, 5
      %p65 = por %p63, %p64
      %p66 = scmp.ne.s32.totalorder %s58, %s61
      %p67 = scmp.eq.s32.totalorder %s10, 0
      %p68 = por %p66, %p67
      %p69 = scmp.ne.s32.totalorder %s58, %s61
      %p70 = scmp.eq.s32.totalorder %s15, 5
      %p71 = por %p69, %p70
      %p72 = scmp.ne.s32.totalorder %s61, %s62
      %p73 = scmp.eq.s32.totalorder %s15, 0
      %p74 = por %p72, %p73
      %p75 = scmp.ne.s32.totalorder %s61, %s62
      %p76 = scmp.eq.s32.totalorder %s16, 5
      %p77 = por %p75, %p76
      %p79 = scmp.ne.s32.totalorder %s62, %s78
      %p80 = scmp.eq.s32.totalorder %s16, 0
      %p81 = por %p79, %p80
      %s82 = ssub.s32 %s18, %s25
      %p83 = scmp.eq.s32.totalorder %s82, 0
      %s85 = sadd.s32 %s84, 1
      %s86 = scalar_select %p83, %s84, %s85
      %p89 = pneg %p83
      %p90 = scmp.eq.s32.totalorder %s10, 5
      %p91 = por %p89, %p90
      %p92 = scmp.ne.s32.totalorder %s84, %s87
      %p93 = scmp.eq.s32.totalorder %s10, 0
      %p94 = por %p92, %p93
      %p95 = scmp.ne.s32.totalorder %s84, %s87
      %p96 = scmp.eq.s32.totalorder %s15, 5
      %p97 = por %p95, %p96
      %p98 = scmp.ne.s32.totalorder %s87, %s88
      %p99 = scmp.eq.s32.totalorder %s15, 0
      %p100 = por %p98, %p99
      %p101 = scmp.ne.s32.totalorder %s87, %s88
      %p102 = scmp.eq.s32.totalorder %s16, 5
      %p103 = por %p101, %p102
      %p105 = scmp.ne.s32.totalorder %s88, %s104
      %p106 = scmp.eq.s32.totalorder %s16, 0
      %p107 = por %p105, %p106
      %s108 = ssub.s32 %s18, %s25
      %p109 = scmp.eq.s32.totalorder %s108, 0
      %s111 = sadd.s32 %s110, 1
      %s112 = scalar_select %p109, %s110, %s111
      %p115 = pneg %p109
      %p116 = scmp.eq.s32.totalorder %s10, 5
      %p117 = por %p115, %p116
      %p118 = scmp.ne.s32.totalorder %s110, %s113
      %p119 = scmp.eq.s32.totalorder %s10, 0
      %p120 = por %p118, %p119
      %p121 = scmp.ne.s32.totalorder %s110, %s113
      %p122 = scmp.eq.s32.totalorder %s15, 5
      %p123 = por %p121, %p122
      %p124 = scmp.ne.s32.totalorder %s113, %s114
      %p125 = scmp.eq.s32.totalorder %s15, 0
      %p126 = por %p124, %p125
      %p127 = scmp.ne.s32.totalorder %s113, %s114
      %p128 = scmp.eq.s32.totalorder %s16, 5
      %p129 = por %p127, %p128
      %p131 = scmp.ne.s32.totalorder %s114, %s130
      %p132 = scmp.eq.s32.totalorder %s16, 0
      %p133 = por %p131, %p132
      %s134 = ssub.s32 %s17, %s29
      %s135 = ssub.s32 %s18, %s25
      %s136 = sor.u32 %s134, %s135
      %p137 = scmp.eq.s32.totalorder %s136, 0
      %s139 = sadd.s32 %s138, 1
      %s140 = scalar_select %p137, %s138, %s139
      %p143 = pneg %p137
      %p144 = scmp.eq.s32.totalorder %s10, 5
      %p145 = por %p143, %p144
      %p146 = scmp.ne.s32.totalorder %s138, %s141
      %p147 = scmp.eq.s32.totalorder %s10, 0
      %p148 = por %p146, %p147
      %p149 = scmp.ne.s32.totalorder %s138, %s141
      %p150 = scmp.eq.s32.totalorder %s15, 5
      %p151 = por %p149, %p150
      %p152 = scmp.ne.s32.totalorder %s141, %s142
      %p153 = scmp.eq.s32.totalorder %s15, 0
      %p154 = por %p152, %p153
      %p155 = scmp.ne.s32.totalorder %s141, %s142
      %p156 = scmp.eq.s32.totalorder %s16, 5
      %p157 = por %p155, %p156
      %p159 = scmp.ne.s32.totalorder %s142, %s158
      %p160 = scmp.eq.s32.totalorder %s16, 0
      %p161 = por %p159, %p160
      %p162 = scmp.le.s32.totalorder 1, %s10
      %p163 = scmp.lt.s32.totalorder %s10, 7
      %p164 = pnand %p162, %p163
      %p165 = pneg %p164
      // Predicated region
      $region9: #{_conv_bn_relu.1} parent=5 // pred_check
        _
      $region10: #{_conv_bn_relu.1} parent=5 // pred_check_branch
        %167 = sbr.rel (%p164) target = $region12
      $region11: #{_conv_bn_relu.1} parent=5 // pred_region
        %s168 = ssub.s32 %s10, 1
        // Predicated region
        $region13: #{_conv_bn_relu.1} parent=11 // pred_check
          %p169 = pneg %p74
        $region14: #{_conv_bn_relu.1} parent=11 // pred_check_branch
          %171 = sbr.rel (%p169) target = $region16
        $region15: #{_conv_bn_relu.1} parent=11 // pred_region
          %p172 = scmp.lt.s32.totalorder %s20, 0
          %s173 = scalar_select %p172, %s20, 0
          %s174 = smul.addr %s173, 4
          %s175 = scalar_lea.vmem %s1, %s174
        $region16: #{_conv_bn_relu.1} parent=11 // pred_fallthru
          _
        // Predicated region
        $region17: #{_conv_bn_relu.1} parent=11 // pred_check
          %p176 = pneg %p100
        $region18: #{_conv_bn_relu.1} parent=11 // pred_check_branch
          %178 = sbr.rel (%p176) target = $region20
        $region19: #{_conv_bn_relu.1} parent=11 // pred_region
          %p179 = scmp.lt.s32.totalorder %s20, 0
          %s180 = scalar_select %p179, %s20, 0
          %s181 = scalar_lea.vmem %s2, %s180
        $region20: #{_conv_bn_relu.1} parent=11 // pred_fallthru
          _
        // Predicated region
        $region21: #{_conv_bn_relu.1} parent=11 // pred_check
          %p182 = pneg %p126
        $region22: #{_conv_bn_relu.1} parent=11 // pred_check_branch
          %184 = sbr.rel (%p182) target = $region24
        $region23: #{_conv_bn_relu.1} parent=11 // pred_region
          %p185 = scmp.lt.s32.totalorder %s20, 0
          %s186 = scalar_select %p185, %s20, 0
          %s187 = scalar_lea.vmem %s3, %s186
        $region24: #{_conv_bn_relu.1} parent=11 // pred_fallthru
          _
      $region12: #{_conv_bn_relu.1} parent=5 // pred_fallthru
        _
      %p188 = scmp.lt.s32.totalorder %s10, 6
      // Predicated region
      $region25: #{_conv_bn_relu.1} parent=5 // pred_check
        %p189 = pneg %p188
      $region26: #{_conv_bn_relu.1} parent=5 // pred_check_branch
        %191 = sbr.rel (%p189) target = $region28
      $region27: #{_conv_bn_relu.1} parent=5 // pred_region
        // Predicated region
        $region29: #{_conv_bn_relu.1} parent=27 // pred_check
          %p192 = pneg %p42
        $region30: #{_conv_bn_relu.1} parent=27 // pred_check_branch
          %194 = sbr.rel (%p192) target = $region32
        $region31: #{_conv_bn_relu.1} parent=27 // pred_region
          %s195 = smul.u32 64, %s17
          %s196 = ssub.s32 343, %s195
          %p197 = scmp.lt.s32.totalorder %s196, 64
          %s198 = scalar_select %p197, %s196, 64
          %s199 = smul.u32 64, %s198
          %p200 = scmp.lt.s32.totalorder %s195, 342
          %s201 = scalar_select %p200, %s195, 342
          %s202 = smul.addr %s201, 4
          %s203 = scalar_lea.vmem %s0, %s202
          %s204 = smul.u32 64, %s17
          %s205 = ssub.s32 343, %s204
          %p206 = scmp.lt.s32.totalorder %s205, 64
          %s207 = scalar_select %p206, %s205, 64
          %s208 = smul.u32 64, %s207
        $region32: #{_conv_bn_relu.1} parent=27 // pred_fallthru
          _
      $region28: #{_conv_bn_relu.1} parent=5 // pred_fallthru
        _
      %p209 = scmp.le.s32.totalorder 1, %s10
      %p210 = scmp.lt.s32.totalorder %s10, 7
      %p211 = pnand %p209, %p210
      %p212 = pneg %p211
      // Predicated region
      $region33: #{_conv_bn_relu.1} parent=5 // pred_check
        _
      $region34: #{_conv_bn_relu.1} parent=5 // pred_check_branch
        %214 = sbr.rel (%p211) target = $region36
      $region35: #{_conv_bn_relu.1} parent=5 // pred_region
        %s215 = ssub.s32 %s10, 1
        %s216 = smul.u32 64, %s19
        %s217 = ssub.s32 343, %s216
        %p218 = scmp.lt.s32.totalorder %s217, 64
        %s219 = scalar_select %p218, %s217, 64
        %s220 = smul.u32 64, %s219
        %p221 = scmp.lt.s32.totalorder %s216, 342
        %s222 = scalar_select %p221, %s216, 342
        %s223 = smul.addr %s222, 4
        %s224 = scalar_lea.vmem %s0, %s223
        %p225 = pneg %p48
        %p226 = pneg %p45
        %p227 = scmp.lt.s32.totalorder %s20, 0
        %s228 = scalar_select %p227, %s20, 0
        %s229 = smul.addr %s228, 4
        %s230 = scalar_lea.vmem %s1, %s229
        %p231 = pneg %p74
        %p232 = pneg %p71
        %p233 = scmp.lt.s32.totalorder %s20, 0
        %s234 = scalar_select %p233, %s20, 0
        %s235 = scalar_lea.vmem %s2, %s234
        %p236 = pneg %p100
        %p237 = pneg %p97
        %p238 = scmp.lt.s32.totalorder %s20, 0
        %s239 = scalar_select %p238, %s20, 0
        %s240 = scalar_lea.vmem %s3, %s239
        %p241 = pneg %p126
        %p242 = pneg %p123
        %p243 = pneg %p154
        %p244 = pneg %p151
        %s245 = sand.u32 %s141, 1
        %s246 = sand.u32 %s141, 1
        %s247 = smul.addr %s246, 256
        %s248 = scalar_lea.vmem [#allocation2], %s247
        %s249 = smul.u32 64, %s19
        %s250 = ssub.s32 343, %s249
        %p251 = scmp.lt.s32.totalorder %s250, 64
        %s252 = scalar_select %p251, %s250, 64
        %s253 = smul.u32 64, %s252
        %p254 = scmp.lt.s32.totalorder %s249, 342
        %s255 = scalar_select %p254, %s249, 342
        %s256 = smul.addr %s255, 4
        %s257 = scalar_lea.vmem %s0, %s256
        %s258 = smul.u32 64, %s19
        %s259 = ssub.s32 343, %s258
        %p260 = scmp.lt.s32.totalorder %s259, 64
        %s261 = scalar_select %p260, %s259, 64
        %s262 = smul.u32 64, %s261
        %p263 = scmp.lt.s32.totalorder %s20, 0
        %s264 = scalar_select %p263, %s20, 0
        %s265 = smul.addr %s264, 4
        %s266 = scalar_lea.vmem %s1, %s265
        %p267 = scmp.lt.s32.totalorder %s20, 0
        %s268 = scalar_select %p267, %s20, 0
        %s269 = scalar_lea.vmem %s2, %s268
        %p270 = scmp.lt.s32.totalorder %s20, 0
        %s271 = scalar_select %p270, %s20, 0
        %s272 = scalar_lea.vmem %s3, %s271
        %s273 = smul.u32 64, %s19
        %s274 = ssub.s32 343, %s273
        %p275 = scmp.lt.s32.totalorder %s274, 64
        %s276 = scalar_select %p275, %s274, 64
        %s277 = smul.u32 64, %s276
        %v279 = vld [vmem:[%s257] sm:$0xf]
        %v280 = vld [vmem:[%s257 + $0x4] sm:$0xf]
        %v281 = vld [vmem:[%s257 + $0x8] sm:$0xf]
        %v282 = vld [vmem:[%s257 + $0xc] sm:$0xf]
        %v283 = vld [vmem:[%s257 + $0x10] sm:$0xf]
        %v284 = vld [vmem:[%s257 + $0x14] sm:$0xf]
        %v285 = vld [vmem:[%s257 + $0x18] sm:$0xf]
        %v286 = vld [vmem:[%s257 + $0x1c] sm:$0xf]
        %v287 = vld [vmem:[%s257 + $0x20] sm:$0xf]
        %v288 = vld [vmem:[%s257 + $0x24] sm:$0xf]
        %v289 = vld [vmem:[%s257 + $0x28] sm:$0xf]
        %v290 = vld [vmem:[%s257 + $0x2c] sm:$0xf]
        %v291 = vld [vmem:[%s257 + $0x30] sm:$0xf]
        %v292 = vld [vmem:[%s257 + $0x34] sm:$0xf]
        %v293 = vld [vmem:[%s257 + $0x38] sm:$0xf]
        %v294 = vld [vmem:[%s257 + $0x3c] sm:$0xf]
        %v295 = vld [vmem:[%s257 + $0x40] sm:$0xf]
        %v296 = vld [vmem:[%s257 + $0x44] sm:$0xf]
        %v297 = vld [vmem:[%s257 + $0x48] sm:$0xf]
        %v298 = vld [vmem:[%s257 + $0x4c] sm:$0xf]
        %v299 = vld [vmem:[%s257 + $0x50] sm:$0xf]
        %v300 = vld [vmem:[%s257 + $0x54] sm:$0xf]
        %v301 = vld [vmem:[%s257 + $0x58] sm:$0xf]
        %v302 = vld [vmem:[%s257 + $0x5c] sm:$0xf]
        %v303 = vld [vmem:[%s257 + $0x60] sm:$0xf]
        %v304 = vld [vmem:[%s257 + $0x64] sm:$0xf]
        %v305 = vld [vmem:[%s257 + $0x68] sm:$0xf]
        %v306 = vld [vmem:[%s257 + $0x6c] sm:$0xf]
        %v307 = vld [vmem:[%s257 + $0x70] sm:$0xf]
        %v308 = vld [vmem:[%s257 + $0x74] sm:$0xf]
        %v309 = vld [vmem:[%s257 + $0x78] sm:$0xf]
        %v310 = vld [vmem:[%s257 + $0x7c] sm:$0xf]
        %v311 = vld [vmem:[%s257 + $0x80] sm:$0xf]
        %v312 = vld [vmem:[%s257 + $0x84] sm:$0xf]
        %v313 = vld [vmem:[%s257 + $0x88] sm:$0xf]
        %v314 = vld [vmem:[%s257 + $0x8c] sm:$0xf]
        %v315 = vld [vmem:[%s257 + $0x90] sm:$0xf]
        %v316 = vld [vmem:[%s257 + $0x94] sm:$0xf]
        %v317 = vld [vmem:[%s257 + $0x98] sm:$0xf]
        %v318 = vld [vmem:[%s257 + $0x9c] sm:$0xf]
        %v319 = vld [vmem:[%s257 + $0xa0] sm:$0xf]
        %v320 = vld [vmem:[%s257 + $0xa4] sm:$0xf]
        %v321 = vld [vmem:[%s257 + $0xa8] sm:$0xf]
        %v322 = vld [vmem:[%s257 + $0xac] sm:$0xf]
        %v323 = vld [vmem:[%s257 + $0xb0] sm:$0xf]
        %v324 = vld [vmem:[%s257 + $0xb4] sm:$0xf]
        %v325 = vld [vmem:[%s257 + $0xb8] sm:$0xf]
        %v326 = vld [vmem:[%s257 + $0xbc] sm:$0xf]
        %v327 = vld [vmem:[%s257 + $0xc0] sm:$0xf]
        %v328 = vld [vmem:[%s257 + $0xc4] sm:$0xf]
        %v329 = vld [vmem:[%s257 + $0xc8] sm:$0xf]
        %v330 = vld [vmem:[%s257 + $0xcc] sm:$0xf]
        %v331 = vld [vmem:[%s257 + $0xd0] sm:$0xf]
        %v332 = vld [vmem:[%s257 + $0xd4] sm:$0xf]
        %v333 = vld [vmem:[%s257 + $0xd8] sm:$0xf]
        %v334 = vld [vmem:[%s257 + $0xdc] sm:$0xf]
        %v335 = vld [vmem:[%s257 + $0xe0] sm:$0xf]
        %v336 = vld [vmem:[%s257 + $0xe4] sm:$0xf]
        %v337 = vld [vmem:[%s257 + $0xe8] sm:$0xf]
        %v338 = vld [vmem:[%s257 + $0xec] sm:$0xf]
        %v339 = vld [vmem:[%s257 + $0xf0] sm:$0xf]
        %v340 = vld [vmem:[%s257 + $0xf4] sm:$0xf]
        %v341 = vld [vmem:[%s257 + $0xf8] sm:$0xf]
        %v342 = vld [vmem:[%s257 + $0xfc] sm:$0xf]
        %v343 = vld [vmem:[%s266] sm:$0xf]
        %v344 = vld [vmem:[%s266 + $0x4] sm:$0xf]
        %v345 = vld [vmem:[%s266 + $0x8] sm:$0xf]
        %v346 = vld [vmem:[%s266 + $0xc] sm:$0x3]
        %v411 = vunpack.c.l.b16 %v279
        %v412 = vunpack.c.l.b16 %v280
        %v413 = vunpack.c.l.b16 %v281
        %v414 = vunpack.c.l.b16 %v282
        %v415 = vunpack.c.l.b16 %v283
        %v416 = vunpack.c.l.b16 %v284
        %v417 = vunpack.c.l.b16 %v285
        %v418 = vunpack.c.l.b16 %v286
        %v419 = vunpack.c.l.b16 %v287
        %v420 = vunpack.c.l.b16 %v288
        %v421 = vunpack.c.l.b16 %v289
        %v422 = vunpack.c.l.b16 %v290
        %v423 = vunpack.c.l.b16 %v291
        %v424 = vunpack.c.l.b16 %v292
        %v425 = vunpack.c.l.b16 %v293
        %v426 = vunpack.c.l.b16 %v294
        %v427 = vunpack.c.l.b16 %v295
        %v428 = vunpack.c.l.b16 %v296
        %v429 = vunpack.c.l.b16 %v297
        %v430 = vunpack.c.l.b16 %v298
        %v431 = vunpack.c.l.b16 %v299
        %v432 = vunpack.c.l.b16 %v300
        %v433 = vunpack.c.l.b16 %v301
        %v434 = vunpack.c.l.b16 %v302
        %v435 = vunpack.c.l.b16 %v303
        %v436 = vunpack.c.l.b16 %v304
        %v437 = vunpack.c.l.b16 %v305
        %v438 = vunpack.c.l.b16 %v306
        %v439 = vunpack.c.l.b16 %v307
        %v440 = vunpack.c.l.b16 %v308
        %v441 = vunpack.c.l.b16 %v309
        %v442 = vunpack.c.l.b16 %v310
        %v443 = vunpack.c.l.b16 %v311
        %v444 = vunpack.c.l.b16 %v312
        %v445 = vunpack.c.l.b16 %v313
        %v446 = vunpack.c.l.b16 %v314
        %v447 = vunpack.c.l.b16 %v315
        %v448 = vunpack.c.l.b16 %v316
        %v449 = vunpack.c.l.b16 %v317
        %v450 = vunpack.c.l.b16 %v318
        %v451 = vunpack.c.l.b16 %v319
        %v452 = vunpack.c.l.b16 %v320
        %v453 = vunpack.c.l.b16 %v321
        %v454 = vunpack.c.l.b16 %v322
        %v455 = vunpack.c.l.b16 %v323
        %v456 = vunpack.c.l.b16 %v324
        %v457 = vunpack.c.l.b16 %v325
        %v458 = vunpack.c.l.b16 %v326
        %v459 = vunpack.c.l.b16 %v327
        %v460 = vunpack.c.l.b16 %v328
        %v461 = vunpack.c.l.b16 %v329
        %v462 = vunpack.c.l.b16 %v330
        %v463 = vunpack.c.l.b16 %v331
        %v464 = vunpack.c.l.b16 %v332
        %v465 = vunpack.c.l.b16 %v333
        %v466 = vunpack.c.l.b16 %v334
        %v467 = vunpack.c.l.b16 %v335
        %v468 = vunpack.c.l.b16 %v336
        %v469 = vunpack.c.l.b16 %v337
        %v470 = vunpack.c.l.b16 %v338
        %v471 = vunpack.c.l.b16 %v339
        %v472 = vunpack.c.l.b16 %v340
        %v473 = vunpack.c.l.b16 %v341
        %v474 = vunpack.c.l.b16 %v342
        %v475 = vpack.c.b16 %v412, %v411
        %v476 = vpack.c.b16 %v414, %v413
        %v477 = vpack.c.b16 %v416, %v415
        %v478 = vpack.c.b16 %v418, %v417
        %v479 = vpack.c.b16 %v420, %v419
        %v480 = vpack.c.b16 %v422, %v421
        %v481 = vpack.c.b16 %v424, %v423
        %v482 = vpack.c.b16 %v426, %v425
        %v483 = vpack.c.b16 %v428, %v427
        %v484 = vpack.c.b16 %v430, %v429
        %v485 = vpack.c.b16 %v432, %v431
        %v486 = vpack.c.b16 %v434, %v433
        %v487 = vpack.c.b16 %v436, %v435
        %v488 = vpack.c.b16 %v438, %v437
        %v489 = vpack.c.b16 %v440, %v439
        %v490 = vpack.c.b16 %v442, %v441
        %v491 = vpack.c.b16 %v444, %v443
        %v492 = vpack.c.b16 %v446, %v445
        %v493 = vpack.c.b16 %v448, %v447
        %v494 = vpack.c.b16 %v450, %v449
        %v495 = vpack.c.b16 %v452, %v451
        %v496 = vpack.c.b16 %v454, %v453
        %v497 = vpack.c.b16 %v456, %v455
        %v498 = vpack.c.b16 %v458, %v457
        %v499 = vpack.c.b16 %v460, %v459
        %v500 = vpack.c.b16 %v462, %v461
        %v501 = vpack.c.b16 %v464, %v463
        %v502 = vpack.c.b16 %v466, %v465
        %v503 = vpack.c.b16 %v468, %v467
        %v504 = vpack.c.b16 %v470, %v469
        %v505 = vpack.c.b16 %v472, %v471
        %v506 = vpack.c.b16 %v474, %v473
        %v511 = vunpack.c.l.b16 %v343
        %v512 = vunpack.c.l.b16 %v344
        %v513 = vunpack.c.l.b16 %v345
        %v514 = vunpack.c.l.b16 %v346
        %v515 = vpack.c.b16 %v512, %v511
        %v516 = vpack.c.b16 %v514, %v513
        %vm518 = vcmask 220160
        %v520 = vsel %vm518, %v475, 0
        %v523 = vsel %vm518, %v476, 0
        %v526 = vsel %vm518, %v477, 0
        %v529 = vsel %vm518, %v478, 0
        %v532 = vsel %vm518, %v479, 0
        %v535 = vsel %vm518, %v480, 0
        %v538 = vsel %vm518, %v481, 0
        %v541 = vsel %vm518, %v482, 0
        %v544 = vsel %vm518, %v483, 0
        %v547 = vsel %vm518, %v484, 0
        %v550 = vsel %vm518, %v485, 0
        %v553 = vsel %vm518, %v486, 0
        %v556 = vsel %vm518, %v487, 0
        %v559 = vsel %vm518, %v488, 0
        %v562 = vsel %vm518, %v489, 0
        %v565 = vsel %vm518, %v490, 0
        %v568 = vsel %vm518, %v491, 0
        %v571 = vsel %vm518, %v492, 0
        %v574 = vsel %vm518, %v493, 0
        %v577 = vsel %vm518, %v494, 0
        %v580 = vsel %vm518, %v495, 0
        %v583 = vsel %vm518, %v496, 0
        %v586 = vsel %vm518, %v497, 0
        %v589 = vsel %vm518, %v498, 0
        %v592 = vsel %vm518, %v499, 0
        %v595 = vsel %vm518, %v500, 0
        %v598 = vsel %vm518, %v501, 0
        %v601 = vsel %vm518, %v502, 0
        %v604 = vsel %vm518, %v503, 0
        %v607 = vsel %vm518, %v504, 0
        %v610 = vsel %vm518, %v505, 0
        %v613 = vsel %vm518, %v506, 0
        %vm615 = vcmask 1044480
        %vm616 = vcmask 1045504
        %v617 = vsel %vm615, 4294967295, 65535
        %v618 = vsel %vm616, %v617, 0
        %v620 = vand.u32 %v516, %v618
        %622 = vmatprep.subr.bf16.mxu0 0
        %623 = vmatpush1.bf16.msra.mxu0 0
        %624 = vmatprep.subr.bf16.mxu0 0
        %625 = vmatpush1.bf16.msra.mxu0 0
        %626 = vmatprep.subr.bf16.mxu0 0
        %627 = vmatpush1.bf16.msra.mxu0 0
        %628 = vmatprep.subr.bf16.mxu0 0
        %629 = vmatpush1.bf16.msra.mxu0 0
        %630 = vmatprep.subr.bf16.mxu0 0
        %631 = vmatpush1.bf16.msra.mxu0 0
        %632 = vmatprep.subr.bf16.mxu0 0
        %633 = vmatpush1.bf16.msra.mxu0 0
        %634 = vmatprep.subr.bf16.mxu0 0
        %635 = vmatpush1.bf16.msra.mxu0 %v620
        %636 = vmatprep.subr.bf16.mxu0 0
        %637 = vmatpush1.bf16.msra.mxu0 %v515
        %638 = vmatprep.subr.bf16.mxu0 0
        %639 = vmatpush2.bf16.msra.mxu0 0
        %640 = vmatprep.subr.bf16.mxu0 0
        %641 = vmatpush2.bf16.msra.mxu0 0
        %642 = vmatprep.subr.bf16.mxu0 0
        %643 = vmatpush2.bf16.msra.mxu0 0
        %644 = vmatprep.subr.bf16.mxu0 0
        %645 = vmatpush2.bf16.msra.mxu0 0
        %646 = vmatprep.subr.bf16.mxu0 0
        %647 = vmatpush2.bf16.msra.mxu0 0
        %648 = vmatprep.subr.bf16.mxu0 0
        %649 = vmatpush2.bf16.msra.mxu0 0
        %650 = vmatprep.subr.bf16.mxu0 0
        %651 = vmatpush2.bf16.msra.mxu0 0
        %652 = vmatprep.subr.bf16.mxu0 0
        %653 = vmatpush2.bf16.msra.mxu0 0
        %654 = vmatprep.mubr.bf16.mxu0 0
        %655 = vmatmul.mubr.bf16.gmra.mxu0 %v520
        %v656 = vpop.f32.mrf.mxu0
        %v657 = vadd.f32 0.0, %v656
        %v658 = vpop.f32.mrf.mxu0
        %v659 = vpop.f32.mrf.mxu0
        %v660 = vadd.f32 0.0, %v659
        %v661 = vpop.f32.mrf.mxu0
        %662 = vmatprep.mubr.bf16.mxu0 0
        %663 = vmatmul.mubr.bf16.gmra.mxu0 %v523
        %v664 = vpop.f32.mrf.mxu0
        %v665 = vadd.f32 0.0, %v664
        %v666 = vpop.f32.mrf.mxu0
        %v667 = vpop.f32.mrf.mxu0
        %v668 = vadd.f32 0.0, %v667
        %v669 = vpop.f32.mrf.mxu0
        %670 = vmatprep.mubr.bf16.mxu0 0
        %671 = vmatmul.mubr.bf16.gmra.mxu0 %v526
        %v672 = vpop.f32.mrf.mxu0
        %v673 = vadd.f32 0.0, %v672
        %v674 = vpop.f32.mrf.mxu0
        %v675 = vpop.f32.mrf.mxu0
        %v676 = vadd.f32 0.0, %v675
        %v677 = vpop.f32.mrf.mxu0
        %678 = vmatprep.mubr.bf16.mxu0 0
        %679 = vmatmul.mubr.bf16.gmra.mxu0 %v529
        %v680 = vpop.f32.mrf.mxu0
        %v681 = vadd.f32 0.0, %v680
        %v682 = vpop.f32.mrf.mxu0
        %v683 = vpop.f32.mrf.mxu0
        %v684 = vadd.f32 0.0, %v683
        %v685 = vpop.f32.mrf.mxu0
        %686 = vmatprep.mubr.bf16.mxu0 0
        %687 = vmatmul.mubr.bf16.gmra.mxu0 %v532
        %v688 = vpop.f32.mrf.mxu0
        %v689 = vadd.f32 0.0, %v688
        %v690 = vpop.f32.mrf.mxu0
        %v691 = vpop.f32.mrf.mxu0
        %v692 = vadd.f32 0.0, %v691
        %v693 = vpop.f32.mrf.mxu0
        %694 = vmatprep.mubr.bf16.mxu0 0
        %695 = vmatmul.mubr.bf16.gmra.mxu0 %v535
        %v696 = vpop.f32.mrf.mxu0
        %v697 = vadd.f32 0.0, %v696
        %v698 = vpop.f32.mrf.mxu0
        %v699 = vpop.f32.mrf.mxu0
        %v700 = vadd.f32 0.0, %v699
        %v701 = vpop.f32.mrf.mxu0
        %702 = vmatprep.mubr.bf16.mxu0 0
        %703 = vmatmul.mubr.bf16.gmra.mxu0 %v538
        %v704 = vpop.f32.mrf.mxu0
        %v705 = vadd.f32 0.0, %v704
        %v706 = vpop.f32.mrf.mxu0
        %v707 = vpop.f32.mrf.mxu0
        %v708 = vadd.f32 0.0, %v707
        %v709 = vpop.f32.mrf.mxu0
        %710 = vmatprep.mubr.bf16.mxu0 0
        %711 = vmatmul.mubr.bf16.gmra.mxu0 %v541
        %v712 = vpop.f32.mrf.mxu0
        %v713 = vadd.f32 0.0, %v712
        %v714 = vpop.f32.mrf.mxu0
        %v715 = vpop.f32.mrf.mxu0
        %v716 = vadd.f32 0.0, %v715
        %v717 = vpop.f32.mrf.mxu0
        %718 = vmatprep.mubr.bf16.mxu0 0
        %719 = vmatmul.mubr.bf16.gmra.mxu0 %v544
        %v720 = vpop.f32.mrf.mxu0
        %v721 = vadd.f32 0.0, %v720
        %v722 = vpop.f32.mrf.mxu0
        %v723 = vpop.f32.mrf.mxu0
        %v724 = vadd.f32 0.0, %v723
        %v725 = vpop.f32.mrf.mxu0
        %726 = vmatprep.mubr.bf16.mxu0 0
        %727 = vmatmul.mubr.bf16.gmra.mxu0 %v547
        %v728 = vpop.f32.mrf.mxu0
        %v729 = vadd.f32 0.0, %v728
        %v730 = vpop.f32.mrf.mxu0
        %v731 = vpop.f32.mrf.mxu0
        %v732 = vadd.f32 0.0, %v731
        %v733 = vpop.f32.mrf.mxu0
        %734 = vmatprep.mubr.bf16.mxu0 0
        %735 = vmatmul.mubr.bf16.gmra.mxu0 %v550
        %v736 = vpop.f32.mrf.mxu0
        %v737 = vadd.f32 0.0, %v736
        %v738 = vpop.f32.mrf.mxu0
        %v739 = vpop.f32.mrf.mxu0
        %v740 = vadd.f32 0.0, %v739
        %v741 = vpop.f32.mrf.mxu0
        %742 = vmatprep.mubr.bf16.mxu0 0
        %743 = vmatmul.mubr.bf16.gmra.mxu0 %v553
        %v744 = vpop.f32.mrf.mxu0
        %v745 = vadd.f32 0.0, %v744
        %v746 = vpop.f32.mrf.mxu0
        %v747 = vpop.f32.mrf.mxu0
        %v748 = vadd.f32 0.0, %v747
        %v749 = vpop.f32.mrf.mxu0
        %750 = vmatprep.mubr.bf16.mxu0 0
        %751 = vmatmul.mubr.bf16.gmra.mxu0 %v556
        %v752 = vpop.f32.mrf.mxu0
        %v753 = vadd.f32 0.0, %v752
        %v754 = vpop.f32.mrf.mxu0
        %v755 = vpop.f32.mrf.mxu0
        %v756 = vadd.f32 0.0, %v755
        %v757 = vpop.f32.mrf.mxu0
        %758 = vmatprep.mubr.bf16.mxu0 0
        %759 = vmatmul.mubr.bf16.gmra.mxu0 %v559
        %v760 = vpop.f32.mrf.mxu0
        %v761 = vadd.f32 0.0, %v760
        %v762 = vpop.f32.mrf.mxu0
        %v763 = vpop.f32.mrf.mxu0
        %v764 = vadd.f32 0.0, %v763
        %v765 = vpop.f32.mrf.mxu0
        %766 = vmatprep.mubr.bf16.mxu0 0
        %767 = vmatmul.mubr.bf16.gmra.mxu0 %v562
        %v768 = vpop.f32.mrf.mxu0
        %v769 = vadd.f32 0.0, %v768
        %v770 = vpop.f32.mrf.mxu0
        %v771 = vpop.f32.mrf.mxu0
        %v772 = vadd.f32 0.0, %v771
        %v773 = vpop.f32.mrf.mxu0
        %774 = vmatprep.mubr.bf16.mxu0 0
        %775 = vmatmul.mubr.bf16.gmra.mxu0 %v565
        %v776 = vpop.f32.mrf.mxu0
        %v777 = vadd.f32 0.0, %v776
        %v778 = vpop.f32.mrf.mxu0
        %v779 = vpop.f32.mrf.mxu0
        %v780 = vadd.f32 0.0, %v779
        %v781 = vpop.f32.mrf.mxu0
        %782 = vmatprep.mubr.bf16.mxu0 0
        %783 = vmatmul.mubr.bf16.gmra.mxu0 %v568
        %v784 = vpop.f32.mrf.mxu0
        %v785 = vadd.f32 0.0, %v784
        %v786 = vpop.f32.mrf.mxu0
        %v787 = vpop.f32.mrf.mxu0
        %v788 = vadd.f32 0.0, %v787
        %v789 = vpop.f32.mrf.mxu0
        %790 = vmatprep.mubr.bf16.mxu0 0
        %791 = vmatmul.mubr.bf16.gmra.mxu0 %v571
        %v792 = vpop.f32.mrf.mxu0
        %v793 = vadd.f32 0.0, %v792
        %v794 = vpop.f32.mrf.mxu0
        %v795 = vpop.f32.mrf.mxu0
        %v796 = vadd.f32 0.0, %v795
        %v797 = vpop.f32.mrf.mxu0
        %798 = vmatprep.mubr.bf16.mxu0 0
        %799 = vmatmul.mubr.bf16.gmra.mxu0 %v574
        %v800 = vpop.f32.mrf.mxu0
        %v801 = vadd.f32 0.0, %v800
        %v802 = vpop.f32.mrf.mxu0
        %v803 = vpop.f32.mrf.mxu0
        %v804 = vadd.f32 0.0, %v803
        %v805 = vpop.f32.mrf.mxu0
        %806 = vmatprep.mubr.bf16.mxu0 0
        %807 = vmatmul.mubr.bf16.gmra.mxu0 %v577
        %v808 = vpop.f32.mrf.mxu0
        %v809 = vadd.f32 0.0, %v808
        %v810 = vpop.f32.mrf.mxu0
        %v811 = vpop.f32.mrf.mxu0
        %v812 = vadd.f32 0.0, %v811
        %v813 = vpop.f32.mrf.mxu0
        %814 = vmatprep.mubr.bf16.mxu0 0
        %815 = vmatmul.mubr.bf16.gmra.mxu0 %v580
        %v816 = vpop.f32.mrf.mxu0
        %v817 = vadd.f32 0.0, %v816
        %v818 = vpop.f32.mrf.mxu0
        %v819 = vpop.f32.mrf.mxu0
        %v820 = vadd.f32 0.0, %v819
        %v821 = vpop.f32.mrf.mxu0
        %822 = vmatprep.mubr.bf16.mxu0 0
        %823 = vmatmul.mubr.bf16.gmra.mxu0 %v583
        %v824 = vpop.f32.mrf.mxu0
        %v825 = vadd.f32 0.0, %v824
        %v826 = vpop.f32.mrf.mxu0
        %v827 = vpop.f32.mrf.mxu0
        %v828 = vadd.f32 0.0, %v827
        %v829 = vpop.f32.mrf.mxu0
        %830 = vmatprep.mubr.bf16.mxu0 0
        %831 = vmatmul.mubr.bf16.gmra.mxu0 %v586
        %v832 = vpop.f32.mrf.mxu0
        %v833 = vadd.f32 0.0, %v832
        %v834 = vpop.f32.mrf.mxu0
        %v835 = vpop.f32.mrf.mxu0
        %v836 = vadd.f32 0.0, %v835
        %v837 = vpop.f32.mrf.mxu0
        %838 = vmatprep.mubr.bf16.mxu0 0
        %839 = vmatmul.mubr.bf16.gmra.mxu0 %v589
        %v840 = vpop.f32.mrf.mxu0
        %v841 = vadd.f32 0.0, %v840
        %v842 = vpop.f32.mrf.mxu0
        %v843 = vpop.f32.mrf.mxu0
        %v844 = vadd.f32 0.0, %v843
        %v845 = vpop.f32.mrf.mxu0
        %846 = vmatprep.mubr.bf16.mxu0 0
        %847 = vmatmul.mubr.bf16.gmra.mxu0 %v592
        %v848 = vpop.f32.mrf.mxu0
        %v849 = vadd.f32 0.0, %v848
        %v850 = vpop.f32.mrf.mxu0
        %v851 = vpop.f32.mrf.mxu0
        %v852 = vadd.f32 0.0, %v851
        %v853 = vpop.f32.mrf.mxu0
        %854 = vmatprep.mubr.bf16.mxu0 0
        %855 = vmatmul.mubr.bf16.gmra.mxu0 %v595
        %v856 = vpop.f32.mrf.mxu0
        %v857 = vadd.f32 0.0, %v856
        %v858 = vpop.f32.mrf.mxu0
        %v859 = vpop.f32.mrf.mxu0
        %v860 = vadd.f32 0.0, %v859
        %v861 = vpop.f32.mrf.mxu0
        %862 = vmatprep.mubr.bf16.mxu0 0
        %863 = vmatmul.mubr.bf16.gmra.mxu0 %v598
        %v864 = vpop.f32.mrf.mxu0
        %v865 = vadd.f32 0.0, %v864
        %v866 = vpop.f32.mrf.mxu0
        %v867 = vpop.f32.mrf.mxu0
        %v868 = vadd.f32 0.0, %v867
        %v869 = vpop.f32.mrf.mxu0
        %870 = vmatprep.mubr.bf16.mxu0 0
        %871 = vmatmul.mubr.bf16.gmra.mxu0 %v601
        %v872 = vpop.f32.mrf.mxu0
        %v873 = vadd.f32 0.0, %v872
        %v874 = vpop.f32.mrf.mxu0
        %v875 = vpop.f32.mrf.mxu0
        %v876 = vadd.f32 0.0, %v875
        %v877 = vpop.f32.mrf.mxu0
        %878 = vmatprep.mubr.bf16.mxu0 0
        %879 = vmatmul.mubr.bf16.gmra.mxu0 %v604
        %v880 = vpop.f32.mrf.mxu0
        %v881 = vadd.f32 0.0, %v880
        %v882 = vpop.f32.mrf.mxu0
        %v883 = vpop.f32.mrf.mxu0
        %v884 = vadd.f32 0.0, %v883
        %v885 = vpop.f32.mrf.mxu0
        %886 = vmatprep.mubr.bf16.mxu0 0
        %887 = vmatmul.mubr.bf16.gmra.mxu0 %v607
        %v888 = vpop.f32.mrf.mxu0
        %v889 = vadd.f32 0.0, %v888
        %v890 = vpop.f32.mrf.mxu0
        %v891 = vpop.f32.mrf.mxu0
        %v892 = vadd.f32 0.0, %v891
        %v893 = vpop.f32.mrf.mxu0
        %894 = vmatprep.mubr.bf16.mxu0 0
        %895 = vmatmul.mubr.bf16.gmra.mxu0 %v610
        %v896 = vpop.f32.mrf.mxu0
        %v897 = vadd.f32 0.0, %v896
        %v898 = vpop.f32.mrf.mxu0
        %v899 = vpop.f32.mrf.mxu0
        %v900 = vadd.f32 0.0, %v899
        %v901 = vpop.f32.mrf.mxu0
        %902 = vmatprep.mubr.bf16.mxu0 0
        %903 = vmatmul.mubr.bf16.gmra.mxu0 %v613
        %v904 = vpop.f32.mrf.mxu0
        %v905 = vadd.f32 0.0, %v904
        %v906 = vpop.f32.mrf.mxu0
        %v907 = vpop.f32.mrf.mxu0
        %v908 = vadd.f32 0.0, %v907
        %v909 = vpop.f32.mrf.mxu0
        %910 = vdwg.mxu0
        %v911 = vld [vmem:[%s269] sm:$0x1]
        %v913 = vlaneseq
        %v914 = vshrl.u32 %v913, 7
        %v915 = vsub.s32 0, %v914
        %v916 = vrot.slane %v911, %v915
        %v918 = vmul.f32 %v657, %v916
        %v919 = vmul.f32 %v660, %v916
        %v920 = vmul.f32 %v665, %v916
        %v921 = vmul.f32 %v668, %v916
        %v922 = vmul.f32 %v673, %v916
        %v923 = vmul.f32 %v676, %v916
        %v924 = vmul.f32 %v681, %v916
        %v925 = vmul.f32 %v684, %v916
        %v926 = vmul.f32 %v689, %v916
        %v927 = vmul.f32 %v692, %v916
        %v928 = vmul.f32 %v697, %v916
        %v929 = vmul.f32 %v700, %v916
        %v930 = vmul.f32 %v705, %v916
        %v931 = vmul.f32 %v708, %v916
        %v932 = vmul.f32 %v713, %v916
        %v933 = vmul.f32 %v716, %v916
        %v934 = vmul.f32 %v721, %v916
        %v935 = vmul.f32 %v724, %v916
        %v936 = vmul.f32 %v729, %v916
        %v937 = vmul.f32 %v732, %v916
        %v938 = vmul.f32 %v737, %v916
        %v939 = vmul.f32 %v740, %v916
        %v940 = vmul.f32 %v745, %v916
        %v941 = vmul.f32 %v748, %v916
        %v942 = vmul.f32 %v753, %v916
        %v943 = vmul.f32 %v756, %v916
        %v944 = vmul.f32 %v761, %v916
        %v945 = vmul.f32 %v764, %v916
        %v946 = vmul.f32 %v769, %v916
        %v947 = vmul.f32 %v772, %v916
        %v948 = vmul.f32 %v777, %v916
        %v949 = vmul.f32 %v780, %v916
        %v950 = vmul.f32 %v785, %v916
        %v951 = vmul.f32 %v788, %v916
        %v952 = vmul.f32 %v793, %v916
        %v953 = vmul.f32 %v796, %v916
        %v954 = vmul.f32 %v801, %v916
        %v955 = vmul.f32 %v804, %v916
        %v956 = vmul.f32 %v809, %v916
        %v957 = vmul.f32 %v812, %v916
        %v958 = vmul.f32 %v817, %v916
        %v959 = vmul.f32 %v820, %v916
        %v960 = vmul.f32 %v825, %v916
        %v961 = vmul.f32 %v828, %v916
        %v962 = vmul.f32 %v833, %v916
        %v963 = vmul.f32 %v836, %v916
        %v964 = vmul.f32 %v841, %v916
        %v965 = vmul.f32 %v844, %v916
        %v966 = vmul.f32 %v849, %v916
        %v967 = vmul.f32 %v852, %v916
        %v968 = vmul.f32 %v857, %v916
        %v969 = vmul.f32 %v860, %v916
        %v970 = vmul.f32 %v865, %v916
        %v971 = vmul.f32 %v868, %v916
        %v972 = vmul.f32 %v873, %v916
        %v973 = vmul.f32 %v876, %v916
        %v974 = vmul.f32 %v881, %v916
        %v975 = vmul.f32 %v884, %v916
        %v976 = vmul.f32 %v889, %v916
        %v977 = vmul.f32 %v892, %v916
        %v978 = vmul.f32 %v897, %v916
        %v979 = vmul.f32 %v900, %v916
        %v980 = vmul.f32 %v905, %v916
        %v981 = vmul.f32 %v908, %v916
        %v982 = vld [vmem:[%s272] sm:$0x1]
        %v984 = vlaneseq
        %v985 = vshrl.u32 %v984, 7
        %v986 = vsub.s32 0, %v985
        %v987 = vrot.slane %v982, %v986
        %v989 = vadd.f32 %v918, %v987
        %v990 = vadd.f32 %v919, %v987
        %v991 = vadd.f32 %v920, %v987
        %v992 = vadd.f32 %v921, %v987
        %v993 = vadd.f32 %v922, %v987
        %v994 = vadd.f32 %v923, %v987
        %v995 = vadd.f32 %v924, %v987
        %v996 = vadd.f32 %v925, %v987
        %v997 = vadd.f32 %v926, %v987
        %v998 = vadd.f32 %v927, %v987
        %v999 = vadd.f32 %v928, %v987
        %v1000 = vadd.f32 %v929, %v987
        %v1001 = vadd.f32 %v930, %v987
        %v1002 = vadd.f32 %v931, %v987
        %v1003 = vadd.f32 %v932, %v987
        %v1004 = vadd.f32 %v933, %v987
        %v1005 = vadd.f32 %v934, %v987
        %v1006 = vadd.f32 %v935, %v987
        %v1007 = vadd.f32 %v936, %v987
        %v1008 = vadd.f32 %v937, %v987
        %v1009 = vadd.f32 %v938, %v987
        %v1010 = vadd.f32 %v939, %v987
        %v1011 = vadd.f32 %v940, %v987
        %v1012 = vadd.f32 %v941, %v987
        %v1013 = vadd.f32 %v942, %v987
        %v1014 = vadd.f32 %v943, %v987
        %v1015 = vadd.f32 %v944, %v987
        %v1016 = vadd.f32 %v945, %v987
        %v1017 = vadd.f32 %v946, %v987
        %v1018 = vadd.f32 %v947, %v987
        %v1019 = vadd.f32 %v948, %v987
        %v1020 = vadd.f32 %v949, %v987
        %v1021 = vadd.f32 %v950, %v987
        %v1022 = vadd.f32 %v951, %v987
        %v1023 = vadd.f32 %v952, %v987
        %v1024 = vadd.f32 %v953, %v987
        %v1025 = vadd.f32 %v954, %v987
        %v1026 = vadd.f32 %v955, %v987
        %v1027 = vadd.f32 %v956, %v987
        %v1028 = vadd.f32 %v957, %v987
        %v1029 = vadd.f32 %v958, %v987
        %v1030 = vadd.f32 %v959, %v987
        %v1031 = vadd.f32 %v960, %v987
        %v1032 = vadd.f32 %v961, %v987
        %v1033 = vadd.f32 %v962, %v987
        %v1034 = vadd.f32 %v963, %v987
        %v1035 = vadd.f32 %v964, %v987
        %v1036 = vadd.f32 %v965, %v987
        %v1037 = vadd.f32 %v966, %v987
        %v1038 = vadd.f32 %v967, %v987
        %v1039 = vadd.f32 %v968, %v987
        %v1040 = vadd.f32 %v969, %v987
        %v1041 = vadd.f32 %v970, %v987
        %v1042 = vadd.f32 %v971, %v987
        %v1043 = vadd.f32 %v972, %v987
        %v1044 = vadd.f32 %v973, %v987
        %v1045 = vadd.f32 %v974, %v987
        %v1046 = vadd.f32 %v975, %v987
        %v1047 = vadd.f32 %v976, %v987
        %v1048 = vadd.f32 %v977, %v987
        %v1049 = vadd.f32 %v978, %v987
        %v1050 = vadd.f32 %v979, %v987
        %v1051 = vadd.f32 %v980, %v987
        %v1052 = vadd.f32 %v981, %v987
        %v1053 = vmax.f32 %v989, 0.0
        %v1054 = vmax.f32 %v990, 0.0
        %v1055 = vmax.f32 %v991, 0.0
        %v1056 = vmax.f32 %v992, 0.0
        %v1057 = vmax.f32 %v993, 0.0
        %v1058 = vmax.f32 %v994, 0.0
        %v1059 = vmax.f32 %v995, 0.0
        %v1060 = vmax.f32 %v996, 0.0
        %v1061 = vmax.f32 %v997, 0.0
        %v1062 = vmax.f32 %v998, 0.0
        %v1063 = vmax.f32 %v999, 0.0
        %v1064 = vmax.f32 %v1000, 0.0
        %v1065 = vmax.f32 %v1001, 0.0
        %v1066 = vmax.f32 %v1002, 0.0
        %v1067 = vmax.f32 %v1003, 0.0
        %v1068 = vmax.f32 %v1004, 0.0
        %v1069 = vmax.f32 %v1005, 0.0
        %v1070 = vmax.f32 %v1006, 0.0
        %v1071 = vmax.f32 %v1007, 0.0
        %v1072 = vmax.f32 %v1008, 0.0
        %v1073 = vmax.f32 %v1009, 0.0
        %v1074 = vmax.f32 %v1010, 0.0
        %v1075 = vmax.f32 %v1011, 0.0
        %v1076 = vmax.f32 %v1012, 0.0
        %v1077 = vmax.f32 %v1013, 0.0
        %v1078 = vmax.f32 %v1014, 0.0
        %v1079 = vmax.f32 %v1015, 0.0
        %v1080 = vmax.f32 %v1016, 0.0
        %v1081 = vmax.f32 %v1017, 0.0
        %v1082 = vmax.f32 %v1018, 0.0
        %v1083 = vmax.f32 %v1019, 0.0
        %v1084 = vmax.f32 %v1020, 0.0
        %v1085 = vmax.f32 %v1021, 0.0
        %v1086 = vmax.f32 %v1022, 0.0
        %v1087 = vmax.f32 %v1023, 0.0
        %v1088 = vmax.f32 %v1024, 0.0
        %v1089 = vmax.f32 %v1025, 0.0
        %v1090 = vmax.f32 %v1026, 0.0
        %v1091 = vmax.f32 %v1027, 0.0
        %v1092 = vmax.f32 %v1028, 0.0
        %v1093 = vmax.f32 %v1029, 0.0
        %v1094 = vmax.f32 %v1030, 0.0
        %v1095 = vmax.f32 %v1031, 0.0
        %v1096 = vmax.f32 %v1032, 0.0
        %v1097 = vmax.f32 %v1033, 0.0
        %v1098 = vmax.f32 %v1034, 0.0
        %v1099 = vmax.f32 %v1035, 0.0
        %v1100 = vmax.f32 %v1036, 0.0
        %v1101 = vmax.f32 %v1037, 0.0
        %v1102 = vmax.f32 %v1038, 0.0
        %v1103 = vmax.f32 %v1039, 0.0
        %v1104 = vmax.f32 %v1040, 0.0
        %v1105 = vmax.f32 %v1041, 0.0
        %v1106 = vmax.f32 %v1042, 0.0
        %v1107 = vmax.f32 %v1043, 0.0
        %v1108 = vmax.f32 %v1044, 0.0
        %v1109 = vmax.f32 %v1045, 0.0
        %v1110 = vmax.f32 %v1046, 0.0
        %v1111 = vmax.f32 %v1047, 0.0
        %v1112 = vmax.f32 %v1048, 0.0
        %v1113 = vmax.f32 %v1049, 0.0
        %v1114 = vmax.f32 %v1050, 0.0
        %v1115 = vmax.f32 %v1051, 0.0
        %v1116 = vmax.f32 %v1052, 0.0
        %v1117 = vpack.c.bf16 %v1054, %v1053
        %v1118 = vpack.c.bf16 %v1056, %v1055
        %v1119 = vpack.c.bf16 %v1058, %v1057
        %v1120 = vpack.c.bf16 %v1060, %v1059
        %v1121 = vpack.c.bf16 %v1062, %v1061
        %v1122 = vpack.c.bf16 %v1064, %v1063
        %v1123 = vpack.c.bf16 %v1066, %v1065
        %v1124 = vpack.c.bf16 %v1068, %v1067
        %v1125 = vpack.c.bf16 %v1070, %v1069
        %v1126 = vpack.c.bf16 %v1072, %v1071
        %v1127 = vpack.c.bf16 %v1074, %v1073
        %v1128 = vpack.c.bf16 %v1076, %v1075
        %v1129 = vpack.c.bf16 %v1078, %v1077
        %v1130 = vpack.c.bf16 %v1080, %v1079
        %v1131 = vpack.c.bf16 %v1082, %v1081
        %v1132 = vpack.c.bf16 %v1084, %v1083
        %v1133 = vpack.c.bf16 %v1086, %v1085
        %v1134 = vpack.c.bf16 %v1088, %v1087
        %v1135 = vpack.c.bf16 %v1090, %v1089
        %v1136 = vpack.c.bf16 %v1092, %v1091
        %v1137 = vpack.c.bf16 %v1094, %v1093
        %v1138 = vpack.c.bf16 %v1096, %v1095
        %v1139 = vpack.c.bf16 %v1098, %v1097
        %v1140 = vpack.c.bf16 %v1100, %v1099
        %v1141 = vpack.c.bf16 %v1102, %v1101
        %v1142 = vpack.c.bf16 %v1104, %v1103
        %v1143 = vpack.c.bf16 %v1106, %v1105
        %v1144 = vpack.c.bf16 %v1108, %v1107
        %v1145 = vpack.c.bf16 %v1110, %v1109
        %v1146 = vpack.c.bf16 %v1112, %v1111
        %v1147 = vpack.c.bf16 %v1114, %v1113
        %v1148 = vpack.c.bf16 %v1116, %v1115
        %v1181 = vunpack.c.l.b16 %v1117
        %v1182 = vunpack.c.h.b16 %v1117
        %v1183 = vunpack.c.l.b16 %v1118
        %v1184 = vunpack.c.h.b16 %v1118
        %v1185 = vunpack.c.l.b16 %v1119
        %v1186 = vunpack.c.h.b16 %v1119
        %v1187 = vunpack.c.l.b16 %v1120
        %v1188 = vunpack.c.h.b16 %v1120
        %v1189 = vunpack.c.l.b16 %v1121
        %v1190 = vunpack.c.h.b16 %v1121
        %v1191 = vunpack.c.l.b16 %v1122
        %v1192 = vunpack.c.h.b16 %v1122
        %v1193 = vunpack.c.l.b16 %v1123
        %v1194 = vunpack.c.h.b16 %v1123
        %v1195 = vunpack.c.l.b16 %v1124
        %v1196 = vunpack.c.h.b16 %v1124
        %v1197 = vunpack.c.l.b16 %v1125
        %v1198 = vunpack.c.h.b16 %v1125
        %v1199 = vunpack.c.l.b16 %v1126
        %v1200 = vunpack.c.h.b16 %v1126
        %v1201 = vunpack.c.l.b16 %v1127
        %v1202 = vunpack.c.h.b16 %v1127
        %v1203 = vunpack.c.l.b16 %v1128
        %v1204 = vunpack.c.h.b16 %v1128
        %v1205 = vunpack.c.l.b16 %v1129
        %v1206 = vunpack.c.h.b16 %v1129
        %v1207 = vunpack.c.l.b16 %v1130
        %v1208 = vunpack.c.h.b16 %v1130
        %v1209 = vunpack.c.l.b16 %v1131
        %v1210 = vunpack.c.h.b16 %v1131
        %v1211 = vunpack.c.l.b16 %v1132
        %v1212 = vunpack.c.h.b16 %v1132
        %v1213 = vunpack.c.l.b16 %v1133
        %v1214 = vunpack.c.h.b16 %v1133
        %v1215 = vunpack.c.l.b16 %v1134
        %v1216 = vunpack.c.h.b16 %v1134
        %v1217 = vunpack.c.l.b16 %v1135
        %v1218 = vunpack.c.h.b16 %v1135
        %v1219 = vunpack.c.l.b16 %v1136
        %v1220 = vunpack.c.h.b16 %v1136
        %v1221 = vunpack.c.l.b16 %v1137
        %v1222 = vunpack.c.h.b16 %v1137
        %v1223 = vunpack.c.l.b16 %v1138
        %v1224 = vunpack.c.h.b16 %v1138
        %v1225 = vunpack.c.l.b16 %v1139
        %v1226 = vunpack.c.h.b16 %v1139
        %v1227 = vunpack.c.l.b16 %v1140
        %v1228 = vunpack.c.h.b16 %v1140
        %v1229 = vunpack.c.l.b16 %v1141
        %v1230 = vunpack.c.h.b16 %v1141
        %v1231 = vunpack.c.l.b16 %v1142
        %v1232 = vunpack.c.h.b16 %v1142
        %v1233 = vunpack.c.l.b16 %v1143
        %v1234 = vunpack.c.h.b16 %v1143
        %v1235 = vunpack.c.l.b16 %v1144
        %v1236 = vunpack.c.h.b16 %v1144
        %v1237 = vunpack.c.l.b16 %v1145
        %v1238 = vunpack.c.h.b16 %v1145
        %v1239 = vunpack.c.l.b16 %v1146
        %v1240 = vunpack.c.h.b16 %v1146
        %v1241 = vunpack.c.l.b16 %v1147
        %v1242 = vunpack.c.h.b16 %v1147
        %v1243 = vunpack.c.l.b16 %v1148
        %v1244 = vunpack.c.h.b16 %v1148
        %v1245 = vpack.c.b16 %v1181, %v1181
        %v1246 = vpack.c.b16 %v1182, %v1182
        %v1247 = vpack.c.b16 %v1183, %v1183
        %v1248 = vpack.c.b16 %v1184, %v1184
        %v1249 = vpack.c.b16 %v1185, %v1185
        %v1250 = vpack.c.b16 %v1186, %v1186
        %v1251 = vpack.c.b16 %v1187, %v1187
        %v1252 = vpack.c.b16 %v1188, %v1188
        %v1253 = vpack.c.b16 %v1189, %v1189
        %v1254 = vpack.c.b16 %v1190, %v1190
        %v1255 = vpack.c.b16 %v1191, %v1191
        %v1256 = vpack.c.b16 %v1192, %v1192
        %v1257 = vpack.c.b16 %v1193, %v1193
        %v1258 = vpack.c.b16 %v1194, %v1194
        %v1259 = vpack.c.b16 %v1195, %v1195
        %v1260 = vpack.c.b16 %v1196, %v1196
        %v1261 = vpack.c.b16 %v1197, %v1197
        %v1262 = vpack.c.b16 %v1198, %v1198
        %v1263 = vpack.c.b16 %v1199, %v1199
        %v1264 = vpack.c.b16 %v1200, %v1200
        %v1265 = vpack.c.b16 %v1201, %v1201
        %v1266 = vpack.c.b16 %v1202, %v1202
        %v1267 = vpack.c.b16 %v1203, %v1203
        %v1268 = vpack.c.b16 %v1204, %v1204
        %v1269 = vpack.c.b16 %v1205, %v1205
        %v1270 = vpack.c.b16 %v1206, %v1206
        %v1271 = vpack.c.b16 %v1207, %v1207
        %v1272 = vpack.c.b16 %v1208, %v1208
        %v1273 = vpack.c.b16 %v1209, %v1209
        %v1274 = vpack.c.b16 %v1210, %v1210
        %v1275 = vpack.c.b16 %v1211, %v1211
        %v1276 = vpack.c.b16 %v1212, %v1212
        %v1277 = vpack.c.b16 %v1213, %v1213
        %v1278 = vpack.c.b16 %v1214, %v1214
        %v1279 = vpack.c.b16 %v1215, %v1215
        %v1280 = vpack.c.b16 %v1216, %v1216
        %v1281 = vpack.c.b16 %v1217, %v1217
        %v1282 = vpack.c.b16 %v1218, %v1218
        %v1283 = vpack.c.b16 %v1219, %v1219
        %v1284 = vpack.c.b16 %v1220, %v1220
        %v1285 = vpack.c.b16 %v1221, %v1221
        %v1286 = vpack.c.b16 %v1222, %v1222
        %v1287 = vpack.c.b16 %v1223, %v1223
        %v1288 = vpack.c.b16 %v1224, %v1224
        %v1289 = vpack.c.b16 %v1225, %v1225
        %v1290 = vpack.c.b16 %v1226, %v1226
        %v1291 = vpack.c.b16 %v1227, %v1227
        %v1292 = vpack.c.b16 %v1228, %v1228
        %v1293 = vpack.c.b16 %v1229, %v1229
        %v1294 = vpack.c.b16 %v1230, %v1230
        %v1295 = vpack.c.b16 %v1231, %v1231
        %v1296 = vpack.c.b16 %v1232, %v1232
        %v1297 = vpack.c.b16 %v1233, %v1233
        %v1298 = vpack.c.b16 %v1234, %v1234
        %v1299 = vpack.c.b16 %v1235, %v1235
        %v1300 = vpack.c.b16 %v1236, %v1236
        %v1301 = vpack.c.b16 %v1237, %v1237
        %v1302 = vpack.c.b16 %v1238, %v1238
        %v1303 = vpack.c.b16 %v1239, %v1239
        %v1304 = vpack.c.b16 %v1240, %v1240
        %v1305 = vpack.c.b16 %v1241, %v1241
        %v1306 = vpack.c.b16 %v1242, %v1242
        %v1307 = vpack.c.b16 %v1243, %v1243
        %v1308 = vpack.c.b16 %v1244, %v1244
        %vm1373 = vcmask 257024
        %1374 = vst.msk [vmem:[%s248] sm:$0xf] %vm1373, %v1245
        %1375 = vst.msk [vmem:[%s248 + $0x4] sm:$0xf] %vm1373, %v1246
        %1376 = vst.msk [vmem:[%s248 + $0x8] sm:$0xf] %vm1373, %v1247
        %1377 = vst.msk [vmem:[%s248 + $0xc] sm:$0xf] %vm1373, %v1248
        %1378 = vst.msk [vmem:[%s248 + $0x10] sm:$0xf] %vm1373, %v1249
        %1379 = vst.msk [vmem:[%s248 + $0x14] sm:$0xf] %vm1373, %v1250
        %1380 = vst.msk [vmem:[%s248 + $0x18] sm:$0xf] %vm1373, %v1251
        %1381 = vst.msk [vmem:[%s248 + $0x1c] sm:$0xf] %vm1373, %v1252
        %1382 = vst.msk [vmem:[%s248 + $0x20] sm:$0xf] %vm1373, %v1253
        %1383 = vst.msk [vmem:[%s248 + $0x24] sm:$0xf] %vm1373, %v1254
        %1384 = vst.msk [vmem:[%s248 + $0x28] sm:$0xf] %vm1373, %v1255
        %1385 = vst.msk [vmem:[%s248 + $0x2c] sm:$0xf] %vm1373, %v1256
        %1386 = vst.msk [vmem:[%s248 + $0x30] sm:$0xf] %vm1373, %v1257
        %1387 = vst.msk [vmem:[%s248 + $0x34] sm:$0xf] %vm1373, %v1258
        %1388 = vst.msk [vmem:[%s248 + $0x38] sm:$0xf] %vm1373, %v1259
        %1389 = vst.msk [vmem:[%s248 + $0x3c] sm:$0xf] %vm1373, %v1260
        %1390 = vst.msk [vmem:[%s248 + $0x40] sm:$0xf] %vm1373, %v1261
        %1391 = vst.msk [vmem:[%s248 + $0x44] sm:$0xf] %vm1373, %v1262
        %1392 = vst.msk [vmem:[%s248 + $0x48] sm:$0xf] %vm1373, %v1263
        %1393 = vst.msk [vmem:[%s248 + $0x4c] sm:$0xf] %vm1373, %v1264
        %1394 = vst.msk [vmem:[%s248 + $0x50] sm:$0xf] %vm1373, %v1265
        %1395 = vst.msk [vmem:[%s248 + $0x54] sm:$0xf] %vm1373, %v1266
        %1396 = vst.msk [vmem:[%s248 + $0x58] sm:$0xf] %vm1373, %v1267
        %1397 = vst.msk [vmem:[%s248 + $0x5c] sm:$0xf] %vm1373, %v1268
        %1398 = vst.msk [vmem:[%s248 + $0x60] sm:$0xf] %vm1373, %v1269
        %1399 = vst.msk [vmem:[%s248 + $0x64] sm:$0xf] %vm1373, %v1270
        %1400 = vst.msk [vmem:[%s248 + $0x68] sm:$0xf] %vm1373, %v1271
        %1401 = vst.msk [vmem:[%s248 + $0x6c] sm:$0xf] %vm1373, %v1272
        %1402 = vst.msk [vmem:[%s248 + $0x70] sm:$0xf] %vm1373, %v1273
        %1403 = vst.msk [vmem:[%s248 + $0x74] sm:$0xf] %vm1373, %v1274
        %1404 = vst.msk [vmem:[%s248 + $0x78] sm:$0xf] %vm1373, %v1275
        %1405 = vst.msk [vmem:[%s248 + $0x7c] sm:$0xf] %vm1373, %v1276
        %1406 = vst.msk [vmem:[%s248 + $0x80] sm:$0xf] %vm1373, %v1277
        %1407 = vst.msk [vmem:[%s248 + $0x84] sm:$0xf] %vm1373, %v1278
        %1408 = vst.msk [vmem:[%s248 + $0x88] sm:$0xf] %vm1373, %v1279
        %1409 = vst.msk [vmem:[%s248 + $0x8c] sm:$0xf] %vm1373, %v1280
        %1410 = vst.msk [vmem:[%s248 + $0x90] sm:$0xf] %vm1373, %v1281
        %1411 = vst.msk [vmem:[%s248 + $0x94] sm:$0xf] %vm1373, %v1282
        %1412 = vst.msk [vmem:[%s248 + $0x98] sm:$0xf] %vm1373, %v1283
        %1413 = vst.msk [vmem:[%s248 + $0x9c] sm:$0xf] %vm1373, %v1284
        %1414 = vst.msk [vmem:[%s248 + $0xa0] sm:$0xf] %vm1373, %v1285
        %1415 = vst.msk [vmem:[%s248 + $0xa4] sm:$0xf] %vm1373, %v1286
        %1416 = vst.msk [vmem:[%s248 + $0xa8] sm:$0xf] %vm1373, %v1287
        %1417 = vst.msk [vmem:[%s248 + $0xac] sm:$0xf] %vm1373, %v1288
        %1418 = vst.msk [vmem:[%s248 + $0xb0] sm:$0xf] %vm1373, %v1289
        %1419 = vst.msk [vmem:[%s248 + $0xb4] sm:$0xf] %vm1373, %v1290
        %1420 = vst.msk [vmem:[%s248 + $0xb8] sm:$0xf] %vm1373, %v1291
        %1421 = vst.msk [vmem:[%s248 + $0xbc] sm:$0xf] %vm1373, %v1292
        %1422 = vst.msk [vmem:[%s248 + $0xc0] sm:$0xf] %vm1373, %v1293
        %1423 = vst.msk [vmem:[%s248 + $0xc4] sm:$0xf] %vm1373, %v1294
        %1424 = vst.msk [vmem:[%s248 + $0xc8] sm:$0xf] %vm1373, %v1295
        %1425 = vst.msk [vmem:[%s248 + $0xcc] sm:$0xf] %vm1373, %v1296
        %1426 = vst.msk [vmem:[%s248 + $0xd0] sm:$0xf] %vm1373, %v1297
        %1427 = vst.msk [vmem:[%s248 + $0xd4] sm:$0xf] %vm1373, %v1298
        %1428 = vst.msk [vmem:[%s248 + $0xd8] sm:$0xf] %vm1373, %v1299
        %1429 = vst.msk [vmem:[%s248 + $0xdc] sm:$0xf] %vm1373, %v1300
        %1430 = vst.msk [vmem:[%s248 + $0xe0] sm:$0xf] %vm1373, %v1301
        %1431 = vst.msk [vmem:[%s248 + $0xe4] sm:$0xf] %vm1373, %v1302
        %1432 = vst.msk [vmem:[%s248 + $0xe8] sm:$0xf] %vm1373, %v1303
        %1433 = vst.msk [vmem:[%s248 + $0xec] sm:$0xf] %vm1373, %v1304
        %1434 = vst.msk [vmem:[%s248 + $0xf0] sm:$0xf] %vm1373, %v1305
        %1435 = vst.msk [vmem:[%s248 + $0xf4] sm:$0xf] %vm1373, %v1306
        %1436 = vst.msk [vmem:[%s248 + $0xf8] sm:$0xf] %vm1373, %v1307
        %1437 = vst.msk [vmem:[%s248 + $0xfc] sm:$0xf] %vm1373, %v1308
        %s1438 = sand.u32 %s141, 1
        %s1439 = sand.u32 %s141, 1
        %s1440 = smul.addr %s1439, 256
        %s1441 = scalar_lea.vmem [#allocation2], %s1440
        // Predicated region
        $region37: #{_conv_bn_relu.1} parent=35 // pred_check
          %p1442 = pneg %p151
        $region38: #{_conv_bn_relu.1} parent=35 // pred_check_branch
          %1444 = sbr.rel (%p1442) target = $region40
        $region39: #{_conv_bn_relu.1} parent=35 // pred_region
          %s1445 = smul.u32 64, %s19
          %s1446 = ssub.s32 343, %s1445
          %p1447 = scmp.lt.s32.totalorder %s1446, 64
          %s1448 = scalar_select %p1447, %s1446, 64
          %s1449 = smul.u32 64, %s1448
          %p1450 = scmp.ne.s32.totalorder 0, %s1449
          %s1451 = sadd.s32 %s20, %s1445
          %s1452 = smul.addr %s1451, 4
          %s1453 = scalar_lea.vmem %s4, %s1452
          // Predicated region
          $region41: #{_conv_bn_relu.1} parent=39 // pred_check
            %p1454 = pneg %p1450
          $region42: #{_conv_bn_relu.1} parent=39 // pred_check_branch
            %1456 = sbr.rel (%p1454) target = $region44
          $region43: #{_conv_bn_relu.1} parent=39 // pred_region
            // Predicated region
            $region45: #{_conv_bn_relu.1} parent=43 // pred_check
              _
            $region46: #{_conv_bn_relu.1} parent=43 // pred_check_branch
              %1458 = sbr.rel target = $region48
            $region47: #{_conv_bn_relu.1} parent=43 // pred_region
              // Predicated region
              $region67: #{_conv_bn_relu.1} parent=47 // pred_check
                _
              $region68: #{_conv_bn_relu.1} parent=47 // pred_check_branch
                %1634 = sbr.rel (0) target = $region70
              $region69: #{_conv_bn_relu.1} parent=47 // pred_region
                %s1636 = ssub.s32 16, 1
                %s1637 = sshrl.u32 %s1448, 6
                // While loop
                $region71: #{_conv_bn_relu.1} parent=69 // loop_pre_header
                  _
                $region72: #{_conv_bn_relu.1} parent=69 // loop_header
                  %s1639 = sphi 0, %s1641
                  %p1640 = scmp.ge.s32.totalorder %s1639, %s1637
                  %s1644 = sphi 0, %s1777
                  %s1645 = sphi %s1441, %s1780
                  %s1646 = sphi %s1453, %s1781
                $region73: #{_conv_bn_relu.1} parent=69 // loop_header_branch
                  %1643 = sbr.rel (%p1640) target = $region77
                $region74: #{_conv_bn_relu.1} parent=69 // loop_body
                  %v1647 = vld [vmem:[%s1645] sm:%s1636]
                  %1648 = vst [vmem:[%s1646] sm:%s1636] %v1647
                  %v1649 = vld [vmem:[%s1645 + $0x4] sm:%s1636]
                  %1650 = vst [vmem:[%s1646 + $0x4] sm:%s1636] %v1649
                  %v1651 = vld [vmem:[%s1645 + $0x8] sm:%s1636]
                  %1652 = vst [vmem:[%s1646 + $0x8] sm:%s1636] %v1651
                  %v1653 = vld [vmem:[%s1645 + $0xc] sm:%s1636]
                  %1654 = vst [vmem:[%s1646 + $0xc] sm:%s1636] %v1653
                  %v1655 = vld [vmem:[%s1645 + $0x10] sm:%s1636]
                  %1656 = vst [vmem:[%s1646 + $0x10] sm:%s1636] %v1655
                  %v1657 = vld [vmem:[%s1645 + $0x14] sm:%s1636]
                  %1658 = vst [vmem:[%s1646 + $0x14] sm:%s1636] %v1657
                  %v1659 = vld [vmem:[%s1645 + $0x18] sm:%s1636]
                  %1660 = vst [vmem:[%s1646 + $0x18] sm:%s1636] %v1659
                  %v1661 = vld [vmem:[%s1645 + $0x1c] sm:%s1636]
                  %1662 = vst [vmem:[%s1646 + $0x1c] sm:%s1636] %v1661
                  %v1663 = vld [vmem:[%s1645 + $0x20] sm:%s1636]
                  %1664 = vst [vmem:[%s1646 + $0x20] sm:%s1636] %v1663
                  %v1665 = vld [vmem:[%s1645 + $0x24] sm:%s1636]
                  %1666 = vst [vmem:[%s1646 + $0x24] sm:%s1636] %v1665
                  %v1667 = vld [vmem:[%s1645 + $0x28] sm:%s1636]
                  %1668 = vst [vmem:[%s1646 + $0x28] sm:%s1636] %v1667
                  %v1669 = vld [vmem:[%s1645 + $0x2c] sm:%s1636]
                  %1670 = vst [vmem:[%s1646 + $0x2c] sm:%s1636] %v1669
                  %v1671 = vld [vmem:[%s1645 + $0x30] sm:%s1636]
                  %1672 = vst [vmem:[%s1646 + $0x30] sm:%s1636] %v1671
                  %v1673 = vld [vmem:[%s1645 + $0x34] sm:%s1636]
                  %1674 = vst [vmem:[%s1646 + $0x34] sm:%s1636] %v1673
                  %v1675 = vld [vmem:[%s1645 + $0x38] sm:%s1636]
                  %1676 = vst [vmem:[%s1646 + $0x38] sm:%s1636] %v1675
                  %v1677 = vld [vmem:[%s1645 + $0x3c] sm:%s1636]
                  %1678 = vst [vmem:[%s1646 + $0x3c] sm:%s1636] %v1677
                  %v1679 = vld [vmem:[%s1645 + $0x40] sm:%s1636]
                  %1680 = vst [vmem:[%s1646 + $0x40] sm:%s1636] %v1679
                  %v1681 = vld [vmem:[%s1645 + $0x44] sm:%s1636]
                  %1682 = vst [vmem:[%s1646 + $0x44] sm:%s1636] %v1681
                  %v1683 = vld [vmem:[%s1645 + $0x48] sm:%s1636]
                  %1684 = vst [vmem:[%s1646 + $0x48] sm:%s1636] %v1683
                  %v1685 = vld [vmem:[%s1645 + $0x4c] sm:%s1636]
                  %1686 = vst [vmem:[%s1646 + $0x4c] sm:%s1636] %v1685
                  %v1687 = vld [vmem:[%s1645 + $0x50] sm:%s1636]
                  %1688 = vst [vmem:[%s1646 + $0x50] sm:%s1636] %v1687
                  %v1689 = vld [vmem:[%s1645 + $0x54] sm:%s1636]
                  %1690 = vst [vmem:[%s1646 + $0x54] sm:%s1636] %v1689
                  %v1691 = vld [vmem:[%s1645 + $0x58] sm:%s1636]
                  %1692 = vst [vmem:[%s1646 + $0x58] sm:%s1636] %v1691
                  %v1693 = vld [vmem:[%s1645 + $0x5c] sm:%s1636]
                  %1694 = vst [vmem:[%s1646 + $0x5c] sm:%s1636] %v1693
                  %v1695 = vld [vmem:[%s1645 + $0x60] sm:%s1636]
                  %1696 = vst [vmem:[%s1646 + $0x60] sm:%s1636] %v1695
                  %v1697 = vld [vmem:[%s1645 + $0x64] sm:%s1636]
                  %1698 = vst [vmem:[%s1646 + $0x64] sm:%s1636] %v1697
                  %v1699 = vld [vmem:[%s1645 + $0x68] sm:%s1636]
                  %1700 = vst [vmem:[%s1646 + $0x68] sm:%s1636] %v1699
                  %v1701 = vld [vmem:[%s1645 + $0x6c] sm:%s1636]
                  %1702 = vst [vmem:[%s1646 + $0x6c] sm:%s1636] %v1701
                  %v1703 = vld [vmem:[%s1645 + $0x70] sm:%s1636]
                  %1704 = vst [vmem:[%s1646 + $0x70] sm:%s1636] %v1703
                  %v1705 = vld [vmem:[%s1645 + $0x74] sm:%s1636]
                  %1706 = vst [vmem:[%s1646 + $0x74] sm:%s1636] %v1705
                  %v1707 = vld [vmem:[%s1645 + $0x78] sm:%s1636]
                  %1708 = vst [vmem:[%s1646 + $0x78] sm:%s1636] %v1707
                  %v1709 = vld [vmem:[%s1645 + $0x7c] sm:%s1636]
                  %1710 = vst [vmem:[%s1646 + $0x7c] sm:%s1636] %v1709
                  %v1711 = vld [vmem:[%s1645 + $0x80] sm:%s1636]
                  %1712 = vst [vmem:[%s1646 + $0x80] sm:%s1636] %v1711
                  %v1713 = vld [vmem:[%s1645 + $0x84] sm:%s1636]
                  %1714 = vst [vmem:[%s1646 + $0x84] sm:%s1636] %v1713
                  %v1715 = vld [vmem:[%s1645 + $0x88] sm:%s1636]
                  %1716 = vst [vmem:[%s1646 + $0x88] sm:%s1636] %v1715
                  %v1717 = vld [vmem:[%s1645 + $0x8c] sm:%s1636]
                  %1718 = vst [vmem:[%s1646 + $0x8c] sm:%s1636] %v1717
                  %v1719 = vld [vmem:[%s1645 + $0x90] sm:%s1636]
                  %1720 = vst [vmem:[%s1646 + $0x90] sm:%s1636] %v1719
                  %v1721 = vld [vmem:[%s1645 + $0x94] sm:%s1636]
                  %1722 = vst [vmem:[%s1646 + $0x94] sm:%s1636] %v1721
                  %v1723 = vld [vmem:[%s1645 + $0x98] sm:%s1636]
                  %1724 = vst [vmem:[%s1646 + $0x98] sm:%s1636] %v1723
                  %v1725 = vld [vmem:[%s1645 + $0x9c] sm:%s1636]
                  %1726 = vst [vmem:[%s1646 + $0x9c] sm:%s1636] %v1725
                  %v1727 = vld [vmem:[%s1645 + $0xa0] sm:%s1636]
                  %1728 = vst [vmem:[%s1646 + $0xa0] sm:%s1636] %v1727
                  %v1729 = vld [vmem:[%s1645 + $0xa4] sm:%s1636]
                  %1730 = vst [vmem:[%s1646 + $0xa4] sm:%s1636] %v1729
                  %v1731 = vld [vmem:[%s1645 + $0xa8] sm:%s1636]
                  %1732 = vst [vmem:[%s1646 + $0xa8] sm:%s1636] %v1731
                  %v1733 = vld [vmem:[%s1645 + $0xac] sm:%s1636]
                  %1734 = vst [vmem:[%s1646 + $0xac] sm:%s1636] %v1733
                  %v1735 = vld [vmem:[%s1645 + $0xb0] sm:%s1636]
                  %1736 = vst [vmem:[%s1646 + $0xb0] sm:%s1636] %v1735
                  %v1737 = vld [vmem:[%s1645 + $0xb4] sm:%s1636]
                  %1738 = vst [vmem:[%s1646 + $0xb4] sm:%s1636] %v1737
                  %v1739 = vld [vmem:[%s1645 + $0xb8] sm:%s1636]
                  %1740 = vst [vmem:[%s1646 + $0xb8] sm:%s1636] %v1739
                  %v1741 = vld [vmem:[%s1645 + $0xbc] sm:%s1636]
                  %1742 = vst [vmem:[%s1646 + $0xbc] sm:%s1636] %v1741
                  %v1743 = vld [vmem:[%s1645 + $0xc0] sm:%s1636]
                  %1744 = vst [vmem:[%s1646 + $0xc0] sm:%s1636] %v1743
                  %v1745 = vld [vmem:[%s1645 + $0xc4] sm:%s1636]
                  %1746 = vst [vmem:[%s1646 + $0xc4] sm:%s1636] %v1745
                  %v1747 = vld [vmem:[%s1645 + $0xc8] sm:%s1636]
                  %1748 = vst [vmem:[%s1646 + $0xc8] sm:%s1636] %v1747
                  %v1749 = vld [vmem:[%s1645 + $0xcc] sm:%s1636]
                  %1750 = vst [vmem:[%s1646 + $0xcc] sm:%s1636] %v1749
                  %v1751 = vld [vmem:[%s1645 + $0xd0] sm:%s1636]
                  %1752 = vst [vmem:[%s1646 + $0xd0] sm:%s1636] %v1751
                  %v1753 = vld [vmem:[%s1645 + $0xd4] sm:%s1636]
                  %1754 = vst [vmem:[%s1646 + $0xd4] sm:%s1636] %v1753
                  %v1755 = vld [vmem:[%s1645 + $0xd8] sm:%s1636]
                  %1756 = vst [vmem:[%s1646 + $0xd8] sm:%s1636] %v1755
                  %v1757 = vld [vmem:[%s1645 + $0xdc] sm:%s1636]
                  %1758 = vst [vmem:[%s1646 + $0xdc] sm:%s1636] %v1757
                  %v1759 = vld [vmem:[%s1645 + $0xe0] sm:%s1636]
                  %1760 = vst [vmem:[%s1646 + $0xe0] sm:%s1636] %v1759
                  %v1761 = vld [vmem:[%s1645 + $0xe4] sm:%s1636]
                  %1762 = vst [vmem:[%s1646 + $0xe4] sm:%s1636] %v1761
                  %v1763 = vld [vmem:[%s1645 + $0xe8] sm:%s1636]
                  %1764 = vst [vmem:[%s1646 + $0xe8] sm:%s1636] %v1763
                  %v1765 = vld [vmem:[%s1645 + $0xec] sm:%s1636]
                  %1766 = vst [vmem:[%s1646 + $0xec] sm:%s1636] %v1765
                  %v1767 = vld [vmem:[%s1645 + $0xf0] sm:%s1636]
                  %1768 = vst [vmem:[%s1646 + $0xf0] sm:%s1636] %v1767
                  %v1769 = vld [vmem:[%s1645 + $0xf4] sm:%s1636]
                  %1770 = vst [vmem:[%s1646 + $0xf4] sm:%s1636] %v1769
                  %v1771 = vld [vmem:[%s1645 + $0xf8] sm:%s1636]
                  %1772 = vst [vmem:[%s1646 + $0xf8] sm:%s1636] %v1771
                  %v1773 = vld [vmem:[%s1645 + $0xfc] sm:%s1636]
                  %1774 = vst [vmem:[%s1646 + $0xfc] sm:%s1636] %v1773
                  %s1775 = sadd.s32 1, %s1644
                  %p1776 = scmp.ge.s32.totalorder %s1775, %s1637
                  %s1777 = scalar_select %p1776, 0, %s1775
                  %s1778 = smul.u32 %s1777, 256
                  %s1779 = smul.u32 %s1777, 256
                  %s1780 = scalar_lea.vmem %s1441, %s1778 [#allocation2]
                  %s1781 = scalar_lea.vmem %s1453, %s1779
                $region75: #{_conv_bn_relu.1} parent=69 // loop_footer
                  %s1641 = sadd.s32 %s1639, 1
                $region76: #{_conv_bn_relu.1} parent=69 // loop_footer_branch
                  %1638 = sbr.rel target = $region72
                $region77: #{_conv_bn_relu.1} parent=69 // loop_exit
                  _
                %s1782 = sshrl.u32 %s1448, 6
                %s1783 = sand.u32 %s1448, 63
                %s1784 = smul.u32 %s1782, 64
                %s1785 = smul.u32 4, %s1784
                %s1786 = scalar_lea.vmem %s1441, %s1785 [#allocation2]
                %s1787 = smul.u32 4, %s1784
                %s1788 = scalar_lea.vmem %s1453, %s1787
                // While loop
                $region78: #{_conv_bn_relu.1} parent=69 // loop_pre_header
                  _
                $region79: #{_conv_bn_relu.1} parent=69 // loop_header
                  %s1790 = sphi 0, %s1792
                  %p1791 = scmp.ge.s32.totalorder %s1790, %s1783
                  %s1795 = sphi 0, %s1802
                  %s1796 = sphi %s1786, %s1805
                  %s1797 = sphi %s1788, %s1806
                $region80: #{_conv_bn_relu.1} parent=69 // loop_header_branch
                  %1794 = sbr.rel (%p1791) target = $region84
                $region81: #{_conv_bn_relu.1} parent=69 // loop_body
                  %v1798 = vld [vmem:[%s1796] sm:%s1636]
                  %1799 = vst [vmem:[%s1797] sm:%s1636] %v1798
                  %s1800 = sadd.s32 1, %s1795
                  %p1801 = scmp.ge.s32.totalorder %s1800, %s1783
                  %s1802 = scalar_select %p1801, 0, %s1800
                  %s1803 = smul.u32 %s1802, 4
                  %s1804 = smul.u32 %s1802, 4
                  %s1805 = scalar_lea.vmem %s1786, %s1803 [#allocation2]
                  %s1806 = scalar_lea.vmem %s1788, %s1804
                $region82: #{_conv_bn_relu.1} parent=69 // loop_footer
                  %s1792 = sadd.s32 %s1790, 1
                $region83: #{_conv_bn_relu.1} parent=69 // loop_footer_branch
                  %1789 = sbr.rel target = $region79
                $region84: #{_conv_bn_relu.1} parent=69 // loop_exit
                  _
              $region70: #{_conv_bn_relu.1} parent=47 // pred_fallthru
                _
            $region48: #{_conv_bn_relu.1} parent=43 // pred_fallthru
              _
            // Predicated region
            $region49: #{_conv_bn_relu.1} parent=43 // pred_check
              _
            $region50: #{_conv_bn_relu.1} parent=43 // pred_check_branch
              %1460 = sbr.rel (0) target = $region52
            $region51: #{_conv_bn_relu.1} parent=43 // pred_region
              %s1462 = ssub.s32 16, 1
              %s1463 = sshrl.u32 %s1448, 6
              // While loop
              $region53: #{_conv_bn_relu.1} parent=51 // loop_pre_header
                _
              $region54: #{_conv_bn_relu.1} parent=51 // loop_header
                %s1465 = sphi 0, %s1467
                %p1466 = scmp.ge.s32.totalorder %s1465, %s1463
                %s1470 = sphi 0, %s1603
                %s1471 = sphi %s1441, %s1606
                %s1472 = sphi %s1453, %s1607
              $region55: #{_conv_bn_relu.1} parent=51 // loop_header_branch
                %1469 = sbr.rel (%p1466) target = $region59
              $region56: #{_conv_bn_relu.1} parent=51 // loop_body
                %v1473 = vld [vmem:[%s1471] sm:%s1462]
                %1474 = vst [vmem:[%s1472] sm:%s1462] %v1473
                %v1475 = vld [vmem:[%s1471 + $0x4] sm:%s1462]
                %1476 = vst [vmem:[%s1472 + $0x4] sm:%s1462] %v1475
                %v1477 = vld [vmem:[%s1471 + $0x8] sm:%s1462]
                %1478 = vst [vmem:[%s1472 + $0x8] sm:%s1462] %v1477
                %v1479 = vld [vmem:[%s1471 + $0xc] sm:%s1462]
                %1480 = vst [vmem:[%s1472 + $0xc] sm:%s1462] %v1479
                %v1481 = vld [vmem:[%s1471 + $0x10] sm:%s1462]
                %1482 = vst [vmem:[%s1472 + $0x10] sm:%s1462] %v1481
                %v1483 = vld [vmem:[%s1471 + $0x14] sm:%s1462]
                %1484 = vst [vmem:[%s1472 + $0x14] sm:%s1462] %v1483
                %v1485 = vld [vmem:[%s1471 + $0x18] sm:%s1462]
                %1486 = vst [vmem:[%s1472 + $0x18] sm:%s1462] %v1485
                %v1487 = vld [vmem:[%s1471 + $0x1c] sm:%s1462]
                %1488 = vst [vmem:[%s1472 + $0x1c] sm:%s1462] %v1487
                %v1489 = vld [vmem:[%s1471 + $0x20] sm:%s1462]
                %1490 = vst [vmem:[%s1472 + $0x20] sm:%s1462] %v1489
                %v1491 = vld [vmem:[%s1471 + $0x24] sm:%s1462]
                %1492 = vst [vmem:[%s1472 + $0x24] sm:%s1462] %v1491
                %v1493 = vld [vmem:[%s1471 + $0x28] sm:%s1462]
                %1494 = vst [vmem:[%s1472 + $0x28] sm:%s1462] %v1493
                %v1495 = vld [vmem:[%s1471 + $0x2c] sm:%s1462]
                %1496 = vst [vmem:[%s1472 + $0x2c] sm:%s1462] %v1495
                %v1497 = vld [vmem:[%s1471 + $0x30] sm:%s1462]
                %1498 = vst [vmem:[%s1472 + $0x30] sm:%s1462] %v1497
                %v1499 = vld [vmem:[%s1471 + $0x34] sm:%s1462]
                %1500 = vst [vmem:[%s1472 + $0x34] sm:%s1462] %v1499
                %v1501 = vld [vmem:[%s1471 + $0x38] sm:%s1462]
                %1502 = vst [vmem:[%s1472 + $0x38] sm:%s1462] %v1501
                %v1503 = vld [vmem:[%s1471 + $0x3c] sm:%s1462]
                %1504 = vst [vmem:[%s1472 + $0x3c] sm:%s1462] %v1503
                %v1505 = vld [vmem:[%s1471 + $0x40] sm:%s1462]
                %1506 = vst [vmem:[%s1472 + $0x40] sm:%s1462] %v1505
                %v1507 = vld [vmem:[%s1471 + $0x44] sm:%s1462]
                %1508 = vst [vmem:[%s1472 + $0x44] sm:%s1462] %v1507
                %v1509 = vld [vmem:[%s1471 + $0x48] sm:%s1462]
                %1510 = vst [vmem:[%s1472 + $0x48] sm:%s1462] %v1509
                %v1511 = vld [vmem:[%s1471 + $0x4c] sm:%s1462]
                %1512 = vst [vmem:[%s1472 + $0x4c] sm:%s1462] %v1511
                %v1513 = vld [vmem:[%s1471 + $0x50] sm:%s1462]
                %1514 = vst [vmem:[%s1472 + $0x50] sm:%s1462] %v1513
                %v1515 = vld [vmem:[%s1471 + $0x54] sm:%s1462]
                %1516 = vst [vmem:[%s1472 + $0x54] sm:%s1462] %v1515
                %v1517 = vld [vmem:[%s1471 + $0x58] sm:%s1462]
                %1518 = vst [vmem:[%s1472 + $0x58] sm:%s1462] %v1517
                %v1519 = vld [vmem:[%s1471 + $0x5c] sm:%s1462]
                %1520 = vst [vmem:[%s1472 + $0x5c] sm:%s1462] %v1519
                %v1521 = vld [vmem:[%s1471 + $0x60] sm:%s1462]
                %1522 = vst [vmem:[%s1472 + $0x60] sm:%s1462] %v1521
                %v1523 = vld [vmem:[%s1471 + $0x64] sm:%s1462]
                %1524 = vst [vmem:[%s1472 + $0x64] sm:%s1462] %v1523
                %v1525 = vld [vmem:[%s1471 + $0x68] sm:%s1462]
                %1526 = vst [vmem:[%s1472 + $0x68] sm:%s1462] %v1525
                %v1527 = vld [vmem:[%s1471 + $0x6c] sm:%s1462]
                %1528 = vst [vmem:[%s1472 + $0x6c] sm:%s1462] %v1527
                %v1529 = vld [vmem:[%s1471 + $0x70] sm:%s1462]
                %1530 = vst [vmem:[%s1472 + $0x70] sm:%s1462] %v1529
                %v1531 = vld [vmem:[%s1471 + $0x74] sm:%s1462]
                %1532 = vst [vmem:[%s1472 + $0x74] sm:%s1462] %v1531
                %v1533 = vld [vmem:[%s1471 + $0x78] sm:%s1462]
                %1534 = vst [vmem:[%s1472 + $0x78] sm:%s1462] %v1533
                %v1535 = vld [vmem:[%s1471 + $0x7c] sm:%s1462]
                %1536 = vst [vmem:[%s1472 + $0x7c] sm:%s1462] %v1535
                %v1537 = vld [vmem:[%s1471 + $0x80] sm:%s1462]
                %1538 = vst [vmem:[%s1472 + $0x80] sm:%s1462] %v1537
                %v1539 = vld [vmem:[%s1471 + $0x84] sm:%s1462]
                %1540 = vst [vmem:[%s1472 + $0x84] sm:%s1462] %v1539
                %v1541 = vld [vmem:[%s1471 + $0x88] sm:%s1462]
                %1542 = vst [vmem:[%s1472 + $0x88] sm:%s1462] %v1541
                %v1543 = vld [vmem:[%s1471 + $0x8c] sm:%s1462]
                %1544 = vst [vmem:[%s1472 + $0x8c] sm:%s1462] %v1543
                %v1545 = vld [vmem:[%s1471 + $0x90] sm:%s1462]
                %1546 = vst [vmem:[%s1472 + $0x90] sm:%s1462] %v1545
                %v1547 = vld [vmem:[%s1471 + $0x94] sm:%s1462]
                %1548 = vst [vmem:[%s1472 + $0x94] sm:%s1462] %v1547
                %v1549 = vld [vmem:[%s1471 + $0x98] sm:%s1462]
                %1550 = vst [vmem:[%s1472 + $0x98] sm:%s1462] %v1549
                %v1551 = vld [vmem:[%s1471 + $0x9c] sm:%s1462]
                %1552 = vst [vmem:[%s1472 + $0x9c] sm:%s1462] %v1551
                %v1553 = vld [vmem:[%s1471 + $0xa0] sm:%s1462]
                %1554 = vst [vmem:[%s1472 + $0xa0] sm:%s1462] %v1553
                %v1555 = vld [vmem:[%s1471 + $0xa4] sm:%s1462]
                %1556 = vst [vmem:[%s1472 + $0xa4] sm:%s1462] %v1555
                %v1557 = vld [vmem:[%s1471 + $0xa8] sm:%s1462]
                %1558 = vst [vmem:[%s1472 + $0xa8] sm:%s1462] %v1557
                %v1559 = vld [vmem:[%s1471 + $0xac] sm:%s1462]
                %1560 = vst [vmem:[%s1472 + $0xac] sm:%s1462] %v1559
                %v1561 = vld [vmem:[%s1471 + $0xb0] sm:%s1462]
                %1562 = vst [vmem:[%s1472 + $0xb0] sm:%s1462] %v1561
                %v1563 = vld [vmem:[%s1471 + $0xb4] sm:%s1462]
                %1564 = vst [vmem:[%s1472 + $0xb4] sm:%s1462] %v1563
                %v1565 = vld [vmem:[%s1471 + $0xb8] sm:%s1462]
                %1566 = vst [vmem:[%s1472 + $0xb8] sm:%s1462] %v1565
                %v1567 = vld [vmem:[%s1471 + $0xbc] sm:%s1462]
                %1568 = vst [vmem:[%s1472 + $0xbc] sm:%s1462] %v1567
                %v1569 = vld [vmem:[%s1471 + $0xc0] sm:%s1462]
                %1570 = vst [vmem:[%s1472 + $0xc0] sm:%s1462] %v1569
                %v1571 = vld [vmem:[%s1471 + $0xc4] sm:%s1462]
                %1572 = vst [vmem:[%s1472 + $0xc4] sm:%s1462] %v1571
                %v1573 = vld [vmem:[%s1471 + $0xc8] sm:%s1462]
                %1574 = vst [vmem:[%s1472 + $0xc8] sm:%s1462] %v1573
                %v1575 = vld [vmem:[%s1471 + $0xcc] sm:%s1462]
                %1576 = vst [vmem:[%s1472 + $0xcc] sm:%s1462] %v1575
                %v1577 = vld [vmem:[%s1471 + $0xd0] sm:%s1462]
                %1578 = vst [vmem:[%s1472 + $0xd0] sm:%s1462] %v1577
                %v1579 = vld [vmem:[%s1471 + $0xd4] sm:%s1462]
                %1580 = vst [vmem:[%s1472 + $0xd4] sm:%s1462] %v1579
                %v1581 = vld [vmem:[%s1471 + $0xd8] sm:%s1462]
                %1582 = vst [vmem:[%s1472 + $0xd8] sm:%s1462] %v1581
                %v1583 = vld [vmem:[%s1471 + $0xdc] sm:%s1462]
                %1584 = vst [vmem:[%s1472 + $0xdc] sm:%s1462] %v1583
                %v1585 = vld [vmem:[%s1471 + $0xe0] sm:%s1462]
                %1586 = vst [vmem:[%s1472 + $0xe0] sm:%s1462] %v1585
                %v1587 = vld [vmem:[%s1471 + $0xe4] sm:%s1462]
                %1588 = vst [vmem:[%s1472 + $0xe4] sm:%s1462] %v1587
                %v1589 = vld [vmem:[%s1471 + $0xe8] sm:%s1462]
                %1590 = vst [vmem:[%s1472 + $0xe8] sm:%s1462] %v1589
                %v1591 = vld [vmem:[%s1471 + $0xec] sm:%s1462]
                %1592 = vst [vmem:[%s1472 + $0xec] sm:%s1462] %v1591
                %v1593 = vld [vmem:[%s1471 + $0xf0] sm:%s1462]
                %1594 = vst [vmem:[%s1472 + $0xf0] sm:%s1462] %v1593
                %v1595 = vld [vmem:[%s1471 + $0xf4] sm:%s1462]
                %1596 = vst [vmem:[%s1472 + $0xf4] sm:%s1462] %v1595
                %v1597 = vld [vmem:[%s1471 + $0xf8] sm:%s1462]
                %1598 = vst [vmem:[%s1472 + $0xf8] sm:%s1462] %v1597
                %v1599 = vld [vmem:[%s1471 + $0xfc] sm:%s1462]
                %1600 = vst [vmem:[%s1472 + $0xfc] sm:%s1462] %v1599
                %s1601 = sadd.s32 1, %s1470
                %p1602 = scmp.ge.s32.totalorder %s1601, %s1463
                %s1603 = scalar_select %p1602, 0, %s1601
                %s1604 = smul.u32 %s1603, 256
                %s1605 = smul.u32 %s1603, 256
                %s1606 = scalar_lea.vmem %s1441, %s1604 [#allocation2]
                %s1607 = scalar_lea.vmem %s1453, %s1605
              $region57: #{_conv_bn_relu.1} parent=51 // loop_footer
                %s1467 = sadd.s32 %s1465, 1
              $region58: #{_conv_bn_relu.1} parent=51 // loop_footer_branch
                %1464 = sbr.rel target = $region54
              $region59: #{_conv_bn_relu.1} parent=51 // loop_exit
                _
              %s1608 = sshrl.u32 %s1448, 6
              %s1609 = sand.u32 %s1448, 63
              %s1610 = smul.u32 %s1608, 64
              %s1611 = smul.u32 4, %s1610
              %s1612 = scalar_lea.vmem %s1441, %s1611 [#allocation2]
              %s1613 = smul.u32 4, %s1610
              %s1614 = scalar_lea.vmem %s1453, %s1613
              // While loop
              $region60: #{_conv_bn_relu.1} parent=51 // loop_pre_header
                _
              $region61: #{_conv_bn_relu.1} parent=51 // loop_header
                %s1616 = sphi 0, %s1618
                %p1617 = scmp.ge.s32.totalorder %s1616, %s1609
                %s1621 = sphi 0, %s1628
                %s1622 = sphi %s1612, %s1631
                %s1623 = sphi %s1614, %s1632
              $region62: #{_conv_bn_relu.1} parent=51 // loop_header_branch
                %1620 = sbr.rel (%p1617) target = $region66
              $region63: #{_conv_bn_relu.1} parent=51 // loop_body
                %v1624 = vld [vmem:[%s1622] sm:%s1462]
                %1625 = vst [vmem:[%s1623] sm:%s1462] %v1624
                %s1626 = sadd.s32 1, %s1621
                %p1627 = scmp.ge.s32.totalorder %s1626, %s1609
                %s1628 = scalar_select %p1627, 0, %s1626
                %s1629 = smul.u32 %s1628, 4
                %s1630 = smul.u32 %s1628, 4
                %s1631 = scalar_lea.vmem %s1612, %s1629 [#allocation2]
                %s1632 = scalar_lea.vmem %s1614, %s1630
              $region64: #{_conv_bn_relu.1} parent=51 // loop_footer
                %s1618 = sadd.s32 %s1616, 1
              $region65: #{_conv_bn_relu.1} parent=51 // loop_footer_branch
                %1615 = sbr.rel target = $region61
              $region66: #{_conv_bn_relu.1} parent=51 // loop_exit
                _
            $region52: #{_conv_bn_relu.1} parent=43 // pred_fallthru
              _
          $region44: #{_conv_bn_relu.1} parent=39 // pred_fallthru
            _
          %1807 = vnop
        $region40: #{_conv_bn_relu.1} parent=35 // pred_fallthru
          _
      $region36: #{_conv_bn_relu.1} parent=5 // pred_fallthru
        _
      %p1808 = scmp.le.s32.totalorder 2, %s10
      // Predicated region
      $region85: #{_conv_bn_relu.1} parent=5 // pred_check
        %p1809 = pneg %p1808
      $region86: #{_conv_bn_relu.1} parent=5 // pred_check_branch
        %1811 = sbr.rel (%p1809) target = $region88
      $region87: #{_conv_bn_relu.1} parent=5 // pred_region
        %s1812 = ssub.s32 %s10, 2
        // Predicated region
        $region89: #{_conv_bn_relu.1} parent=87 // pred_check
          %p1813 = pneg %p157
        $region90: #{_conv_bn_relu.1} parent=87 // pred_check_branch
          %1815 = sbr.rel (%p1813) target = $region92
        $region91: #{_conv_bn_relu.1} parent=87 // pred_region
          %s1816 = sand.u32 %s142, 1
          %s1817 = sand.u32 %s142, 1
          %s1818 = smul.addr %s1817, 256
          %s1819 = scalar_lea.vmem [#allocation2], %s1818
        $region92: #{_conv_bn_relu.1} parent=87 // pred_fallthru
          _
      $region88: #{_conv_bn_relu.1} parent=5 // pred_fallthru
        _
    $region6: #{_conv_bn_relu.1} parent=1 // loop_footer
      %s14 = sadd.s32 1, %s10
    $region7: #{_conv_bn_relu.1} parent=1 // loop_footer_branch
      %9 = sbr.rel target = $region3
    $region8: #{_conv_bn_relu.1} parent=1 // loop_exit
      _

</llo_original>
